<compile_context>
chip_gen: v6e
topology: v6e:2x2x1
jax: 0.10.0
libtpu: 0.0.40
codegen_flags: <defaults>
</compile_context>

<pallas_src>
import functools

import numpy as np
import jax
import jax.numpy as jnp
from jax.experimental import pallas as pl
from jax.experimental.pallas import tpu as pltpu


def _round_up(n, m):
    return (n + m - 1) // m * m


def _lmser_kernel(x_ref, we0_ref, we1_ref, we2_ref, wd2_ref, wld_ref, bl_ref,
                  wd1_ref, wd0_ref, x_out_ref, y_out_ref, *, reflect, kp):
    """One batch tile of the LMSER forward, all reflections fused/unrolled."""
    bf16 = jnp.bfloat16
    f32 = jnp.float32

    def mm(a, w):
        # bf16 x bf16 -> f32 accumulation on the MXU.
        return jnp.dot(a, w, preferred_element_type=f32)

    x = x_ref[...].astype(bf16)                      # in-kernel cast (VPU slack)
    y = None
    xf = None
    for r in range(reflect):                         # small static count -> unrolled
        h = mm(x, we0_ref[...]).astype(bf16)         # [tm, Cp]
        h = mm(h, we1_ref[...]).astype(bf16)         # [tm, Cp]
        h = mm(h, we2_ref[...]).astype(bf16)         # [tm, Kp]
        if r == reflect - 1:
            # Fused head + first decoder layer: one 256-wide MXU pass.
            hd = mm(h, wld_ref[...])                 # [tm, Kp+Cp] f32
            y = hd[:, :kp] + bl_ref[...]             # class logits (+bias), f32
            d = hd[:, kp:].astype(bf16)              # [tm, Cp]
        else:
            d = mm(h, wd2_ref[...]).astype(bf16)     # [tm, Cp]
        d = mm(d, wd1_ref[...]).astype(bf16)         # [tm, Cp]
        xf = mm(d, wd0_ref[...])                     # [tm, Dp] f32
        x = xf.astype(bf16)                          # feed back into next reflection
    x_out_ref[...] = xf                              # lane-dense f32 stores
    y_out_ref[...] = y


def lmser_forward(x, params, *, reflect=3, block_b=512):
    """x: [B, img_size*img_size] float32. Returns (x_rec, y) like the module."""
    assert reflect >= 1
    w_e = params["enc"]          # [ (D,C), (C,C), (C,K) ]  -- applied as a @ W
    w_d = params["dec"]          # [ (C,D), (C,C), (K,C) ]  -- applied as a @ W
    w_l = params["head_w"]       # (K, K)
    b_l = params["head_b"]       # (K,)

    B, D = x.shape
    C = w_e[0].shape[1]
    K = w_l.shape[0]

    # Lane-pad every feature dimension to a multiple of 128 (zeros).
    Dp = _round_up(D, 128)
    Cp = _round_up(C, 128)
    Kp = _round_up(K, 128)

    def pad_w(w, rows, cols):
        return jnp.pad(w, ((0, rows - w.shape[0]), (0, cols - w.shape[1]))
                       ).astype(jnp.bfloat16)

    we0 = pad_w(w_e[0], Dp, Cp)
    we1 = pad_w(w_e[1], Cp, Cp)
    we2 = pad_w(w_e[2], Cp, Kp)
    wd2 = pad_w(w_d[2], Kp, Cp)
    wd1 = pad_w(w_d[1], Cp, Cp)
    wd0 = pad_w(w_d[0], Cp, Dp)
    # Fused [head | dec2] weight for the last reflection: (Kp, Kp+Cp).
    wld = jnp.concatenate([pad_w(w_l, Kp, Kp), wd2], axis=1)
    bl = jnp.pad(b_l, (0, Kp - K)).astype(jnp.float32).reshape(1, Kp)

    # Batch tiling: tiles are multiples of 16 rows; batch padded to whole tiles.
    tm = min(block_b, _round_up(B, 16))
    Bp = _round_up(B, tm)
    if Bp // tm == 1 and B >= 512:
        # Keep >=2 grid steps for large batches so v7x's 2 TensorCores both work.
        tm = _round_up(-(-B // 2), 256)
        Bp = _round_up(B, tm)
    grid = (Bp // tm,)

    xp = x
    if (Bp, Dp) != (B, D):
        xp = jnp.pad(x, ((0, Bp - B), (0, Dp - D)))   # stays f32: no wrapper bf16 cast

    weights = (we0, we1, we2, wd2, wld, bl, wd1, wd0)
    weight_bytes = sum(int(w.size) * w.dtype.itemsize for w in weights)
    block_bytes = tm * Dp * 4 + tm * Dp * 4 + tm * Kp * 4     # x in, x out, y out (f32)
    vmem_limit = int(min(32 << 20,
                         max(8 << 20, 2 * block_bytes + 2 * weight_bytes + (4 << 20))))

    const = lambda i: (0, 0)
    x_out, y_out = pl.pallas_call(
        functools.partial(_lmser_kernel, reflect=reflect, kp=Kp),
        out_shape=(
            jax.ShapeDtypeStruct((Bp, Dp), jnp.float32),
            jax.ShapeDtypeStruct((Bp, Kp), jnp.float32),
        ),
        grid=grid,
        in_specs=[
            pl.BlockSpec((tm, Dp), lambda i: (i, 0)),     # x tile (pipelined)
            pl.BlockSpec(we0.shape, const),                # weights: VMEM-resident
            pl.BlockSpec(we1.shape, const),
            pl.BlockSpec(we2.shape, const),
            pl.BlockSpec(wd2.shape, const),
            pl.BlockSpec(wld.shape, const),
            pl.BlockSpec(bl.shape, const),
            pl.BlockSpec(wd1.shape, const),
            pl.BlockSpec(wd0.shape, const),
        ],
        out_specs=[
            pl.BlockSpec((tm, Dp), lambda i: (i, 0)),
            pl.BlockSpec((tm, Kp), lambda i: (i, 0)),
        ],
        compiler_params=pltpu.CompilerParams(
            dimension_semantics=("parallel",),
            vmem_limit_bytes=vmem_limit,
        ),
    )(xp, *weights)

    return x_out[:B, :D], y_out[:B, :K]


def init_lmser_params(key, img_size=16, channel=128, class_num=10, layer_num=3):
    """Mimic the module's init + set_DPN (pinv weight tying, done host-side)."""
    D = img_size * img_size
    dims = []
    for i in range(layer_num):
        in_c, out_c = channel, channel
        if i == 0:
            in_c = D
        if i == layer_num - 1:
            out_c = class_num
        dims.append((in_c, out_c))

    keys = jax.random.split(key, 2 * layer_num + 2)
    enc, dec = [], []
    for i, (in_c, out_c) in enumerate(dims):
        kf, kd = keys[2 * i], keys[2 * i + 1]
        bf = 1.0 / np.sqrt(in_c)
        bd = 1.0 / np.sqrt(out_c)
        # nn.Linear(in_c, out_c).weight  -> (out_c, in_c)
        w_fc = jax.random.uniform(kf, (out_c, in_c), jnp.float32, -bf, bf)
        # nn.Linear(out_c, in_c).weight  -> (in_c, out_c)
        w_dec = jax.random.uniform(kd, (in_c, out_c), jnp.float32, -bd, bd)
        # set_DPN: fc <- (fc + dec^T)/2 ; dec <- pinv(fc)
        w_fc = (w_fc + w_dec.T) / 2.0
        w_dec = jnp.asarray(np.linalg.pinv(np.asarray(w_fc)), dtype=jnp.float32)
        enc.append(w_fc.T)    # (in_c, out_c): encoder applied as a @ W
        dec.append(w_dec.T)   # (out_c, in_c): decoder applied as a @ W
    kw, kb = keys[-2], keys[-1]
    b = 1.0 / np.sqrt(class_num)
    head_w = jax.random.uniform(kw, (class_num, class_num), jnp.float32, -b, b)
    head_b = jax.random.uniform(kb, (class_num,), jnp.float32, -b, b)
    return {"enc": enc, "dec": dec, "head_w": head_w.T, "head_b": head_b}


def lmser_reference(x, params, *, reflect=3):
    """Pure-JAX reference with the same bf16-in / f32-accumulate discipline."""
    bf16 = jnp.bfloat16

    def mm(a, w):
        return jnp.dot(a.astype(bf16), w.astype(bf16),
                       preferred_element_type=jnp.float32)

    we, wd = params["enc"], params["dec"]
    wl, bl = params["head_w"], params["head_b"]
    xx = x
    y = None
    for _ in range(reflect):
        h = mm(xx, we[0])
        h = mm(h, we[1])
        h = mm(h, we[2])
        y = mm(h, wl) + bl
        d = mm(h, wd[2])
        d = mm(d, wd[1])
        xx = mm(d, wd[0])
    return xx, y


if __name__ == "__main__":
    # Small shapes consistent with the module: img_size=16 -> 256 input features
    # (already lane-aligned), channel=128 (module default), class_num=10 (padded
    # to 128 in-kernel), reflect=3.
    B = 128
    img_size = 16
    channel = 128
    class_num = 10
    reflect_num = 3

    key = jax.random.PRNGKey(0)
    k_x, k_w = jax.random.split(key)
    x = jax.random.normal(k_x, (B, img_size * img_size), dtype=jnp.float32)
    params = init_lmser_params(k_w, img_size=img_size, channel=channel,
                               class_num=class_num, layer_num=3)

    x_out, y_out = lmser_forward(x, params, reflect=reflect_num)
    jax.block_until_ready((x_out, y_out))

    x_ref, y_ref = lmser_reference(x, params, reflect=reflect_num)

    assert x_out.shape == (B, img_size * img_size)
    assert y_out.shape == (B, class_num)
    # bf16 MXU path: compare against an identically-cast reference, loose-ish tol.
    assert jnp.allclose(x_out, x_ref, atol=3e-2, rtol=3e-2)
    assert jnp.allclose(y_out, y_ref, atol=3e-2, rtol=3e-2)

    print("KERNEL_OK")
</pallas_src>

<mosaic_0001>
module attributes {stable_mosaic.version = 11 : i64} {
  func.func @_lmser_kernel(%arg0: i32, %arg1: memref<128x256xf32, #tpu.memory_space<vmem>>, %arg2: memref<256x128xbf16, #tpu.memory_space<vmem>>, %arg3: memref<128x128xbf16, #tpu.memory_space<vmem>>, %arg4: memref<128x128xbf16, #tpu.memory_space<vmem>>, %arg5: memref<128x128xbf16, #tpu.memory_space<vmem>>, %arg6: memref<128x256xbf16, #tpu.memory_space<vmem>>, %arg7: memref<1x128xf32, #tpu.memory_space<vmem>>, %arg8: memref<128x128xbf16, #tpu.memory_space<vmem>>, %arg9: memref<128x256xbf16, #tpu.memory_space<vmem>>, %arg10: memref<128x256xf32, #tpu.memory_space<vmem>>, %arg11: memref<128x128xf32, #tpu.memory_space<vmem>>) attributes {dimension_semantics = [#tpu.dimension_semantics<parallel>], iteration_bounds = array<i64: 1>, scalar_prefetch = 0 : i64, scratch_operands = 0 : i64, tpu.core_type = #tpu.core_type<tc>, window_params = [{transform_indices = @transform_0, window_bounds = array<i64: 128, 256>}, {pipeline_mode = #tpu.pipeline_mode<synchronous>, transform_indices = @transform_1, window_bounds = array<i64: 256, 128>}, {pipeline_mode = #tpu.pipeline_mode<synchronous>, transform_indices = @transform_2, window_bounds = array<i64: 128, 128>}, {pipeline_mode = #tpu.pipeline_mode<synchronous>, transform_indices = @transform_3, window_bounds = array<i64: 128, 128>}, {pipeline_mode = #tpu.pipeline_mode<synchronous>, transform_indices = @transform_4, window_bounds = array<i64: 128, 128>}, {pipeline_mode = #tpu.pipeline_mode<synchronous>, transform_indices = @transform_5, window_bounds = array<i64: 128, 256>}, {pipeline_mode = #tpu.pipeline_mode<synchronous>, transform_indices = @transform_6, window_bounds = array<i64: 1, 128>}, {pipeline_mode = #tpu.pipeline_mode<synchronous>, transform_indices = @transform_7, window_bounds = array<i64: 128, 128>}, {pipeline_mode = #tpu.pipeline_mode<synchronous>, transform_indices = @transform_8, window_bounds = array<i64: 128, 256>}, {transform_indices = @transform_9, window_bounds = array<i64: 128, 256>}, {transform_indices = @transform_10, window_bounds = array<i64: 128, 128>}]} {
    %c0 = arith.constant 0 : index
    %c0_0 = arith.constant 0 : index
    %0 = vector.load %arg1[%c0, %c0_0] : memref<128x256xf32, #tpu.memory_space<vmem>>, vector<128x256xf32>
    %1 = arith.truncf %0 : vector<128x256xf32> to vector<128x256xbf16>
    %c0_1 = arith.constant 0 : index
    %c0_2 = arith.constant 0 : index
    %2 = vector.load %arg2[%c0_1, %c0_2] : memref<256x128xbf16, #tpu.memory_space<vmem>>, vector<256x128xbf16>
    %cst = arith.constant dense<0.000000e+00> : vector<128x128xf32>
    %3 = tpu.matmul %1, %2, %cst {dimension_numbers = #tpu.dot_dimension_numbers<[1], [0], [0], [1], [0, 0, 1, 1], [], []>} : vector<128x256xbf16>, vector<256x128xbf16>, vector<128x128xf32> -> vector<128x128xf32>
    %4 = arith.truncf %3 : vector<128x128xf32> to vector<128x128xbf16>
    %c0_3 = arith.constant 0 : index
    %c0_4 = arith.constant 0 : index
    %5 = vector.load %arg3[%c0_3, %c0_4] : memref<128x128xbf16, #tpu.memory_space<vmem>>, vector<128x128xbf16>
    %cst_5 = arith.constant dense<0.000000e+00> : vector<128x128xf32>
    %6 = tpu.matmul %4, %5, %cst_5 {dimension_numbers = #tpu.dot_dimension_numbers<[1], [0], [0], [1], [0, 0, 1, 1], [], []>} : vector<128x128xbf16>, vector<128x128xbf16>, vector<128x128xf32> -> vector<128x128xf32>
    %7 = arith.truncf %6 : vector<128x128xf32> to vector<128x128xbf16>
    %c0_6 = arith.constant 0 : index
    %c0_7 = arith.constant 0 : index
    %8 = vector.load %arg4[%c0_6, %c0_7] : memref<128x128xbf16, #tpu.memory_space<vmem>>, vector<128x128xbf16>
    %cst_8 = arith.constant dense<0.000000e+00> : vector<128x128xf32>
    %9 = tpu.matmul %7, %8, %cst_8 {dimension_numbers = #tpu.dot_dimension_numbers<[1], [0], [0], [1], [0, 0, 1, 1], [], []>} : vector<128x128xbf16>, vector<128x128xbf16>, vector<128x128xf32> -> vector<128x128xf32>
    %10 = arith.truncf %9 : vector<128x128xf32> to vector<128x128xbf16>
    %c0_9 = arith.constant 0 : index
    %c0_10 = arith.constant 0 : index
    %11 = vector.load %arg5[%c0_9, %c0_10] : memref<128x128xbf16, #tpu.memory_space<vmem>>, vector<128x128xbf16>
    %cst_11 = arith.constant dense<0.000000e+00> : vector<128x128xf32>
    %12 = tpu.matmul %10, %11, %cst_11 {dimension_numbers = #tpu.dot_dimension_numbers<[1], [0], [0], [1], [0, 0, 1, 1], [], []>} : vector<128x128xbf16>, vector<128x128xbf16>, vector<128x128xf32> -> vector<128x128xf32>
    %13 = arith.truncf %12 : vector<128x128xf32> to vector<128x128xbf16>
    %c0_12 = arith.constant 0 : index
    %c0_13 = arith.constant 0 : index
    %14 = vector.load %arg8[%c0_12, %c0_13] : memref<128x128xbf16, #tpu.memory_space<vmem>>, vector<128x128xbf16>
    %cst_14 = arith.constant dense<0.000000e+00> : vector<128x128xf32>
    %15 = tpu.matmul %13, %14, %cst_14 {dimension_numbers = #tpu.dot_dimension_numbers<[1], [0], [0], [1], [0, 0, 1, 1], [], []>} : vector<128x128xbf16>, vector<128x128xbf16>, vector<128x128xf32> -> vector<128x128xf32>
    %16 = arith.truncf %15 : vector<128x128xf32> to vector<128x128xbf16>
    %c0_15 = arith.constant 0 : index
    %c0_16 = arith.constant 0 : index
    %17 = vector.load %arg9[%c0_15, %c0_16] : memref<128x256xbf16, #tpu.memory_space<vmem>>, vector<128x256xbf16>
    %cst_17 = arith.constant dense<0.000000e+00> : vector<128x256xf32>
    %18 = tpu.matmul %16, %17, %cst_17 {dimension_numbers = #tpu.dot_dimension_numbers<[1], [0], [0], [1], [0, 0, 1, 1], [], []>} : vector<128x128xbf16>, vector<128x256xbf16>, vector<128x256xf32> -> vector<128x256xf32>
    %19 = arith.truncf %18 : vector<128x256xf32> to vector<128x256xbf16>
    %c0_18 = arith.constant 0 : index
    %c0_19 = arith.constant 0 : index
    %20 = vector.load %arg2[%c0_18, %c0_19] : memref<256x128xbf16, #tpu.memory_space<vmem>>, vector<256x128xbf16>
    %cst_20 = arith.constant dense<0.000000e+00> : vector<128x128xf32>
    %21 = tpu.matmul %19, %20, %cst_20 {dimension_numbers = #tpu.dot_dimension_numbers<[1], [0], [0], [1], [0, 0, 1, 1], [], []>} : vector<128x256xbf16>, vector<256x128xbf16>, vector<128x128xf32> -> vector<128x128xf32>
    %22 = arith.truncf %21 : vector<128x128xf32> to vector<128x128xbf16>
    %c0_21 = arith.constant 0 : index
    %c0_22 = arith.constant 0 : index
    %23 = vector.load %arg3[%c0_21, %c0_22] : memref<128x128xbf16, #tpu.memory_space<vmem>>, vector<128x128xbf16>
    %cst_23 = arith.constant dense<0.000000e+00> : vector<128x128xf32>
    %24 = tpu.matmul %22, %23, %cst_23 {dimension_numbers = #tpu.dot_dimension_numbers<[1], [0], [0], [1], [0, 0, 1, 1], [], []>} : vector<128x128xbf16>, vector<128x128xbf16>, vector<128x128xf32> -> vector<128x128xf32>
    %25 = arith.truncf %24 : vector<128x128xf32> to vector<128x128xbf16>
    %c0_24 = arith.constant 0 : index
    %c0_25 = arith.constant 0 : index
    %26 = vector.load %arg4[%c0_24, %c0_25] : memref<128x128xbf16, #tpu.memory_space<vmem>>, vector<128x128xbf16>
    %cst_26 = arith.constant dense<0.000000e+00> : vector<128x128xf32>
    %27 = tpu.matmul %25, %26, %cst_26 {dimension_numbers = #tpu.dot_dimension_numbers<[1], [0], [0], [1], [0, 0, 1, 1], [], []>} : vector<128x128xbf16>, vector<128x128xbf16>, vector<128x128xf32> -> vector<128x128xf32>
    %28 = arith.truncf %27 : vector<128x128xf32> to vector<128x128xbf16>
    %c0_27 = arith.constant 0 : index
    %c0_28 = arith.constant 0 : index
    %29 = vector.load %arg5[%c0_27, %c0_28] : memref<128x128xbf16, #tpu.memory_space<vmem>>, vector<128x128xbf16>
    %cst_29 = arith.constant dense<0.000000e+00> : vector<128x128xf32>
    %30 = tpu.matmul %28, %29, %cst_29 {dimension_numbers = #tpu.dot_dimension_numbers<[1], [0], [0], [1], [0, 0, 1, 1], [], []>} : vector<128x128xbf16>, vector<128x128xbf16>, vector<128x128xf32> -> vector<128x128xf32>
    %31 = arith.truncf %30 : vector<128x128xf32> to vector<128x128xbf16>
    %c0_30 = arith.constant 0 : index
    %c0_31 = arith.constant 0 : index
    %32 = vector.load %arg8[%c0_30, %c0_31] : memref<128x128xbf16, #tpu.memory_space<vmem>>, vector<128x128xbf16>
    %cst_32 = arith.constant dense<0.000000e+00> : vector<128x128xf32>
    %33 = tpu.matmul %31, %32, %cst_32 {dimension_numbers = #tpu.dot_dimension_numbers<[1], [0], [0], [1], [0, 0, 1, 1], [], []>} : vector<128x128xbf16>, vector<128x128xbf16>, vector<128x128xf32> -> vector<128x128xf32>
    %34 = arith.truncf %33 : vector<128x128xf32> to vector<128x128xbf16>
    %c0_33 = arith.constant 0 : index
    %c0_34 = arith.constant 0 : index
    %35 = vector.load %arg9[%c0_33, %c0_34] : memref<128x256xbf16, #tpu.memory_space<vmem>>, vector<128x256xbf16>
    %cst_35 = arith.constant dense<0.000000e+00> : vector<128x256xf32>
    %36 = tpu.matmul %34, %35, %cst_35 {dimension_numbers = #tpu.dot_dimension_numbers<[1], [0], [0], [1], [0, 0, 1, 1], [], []>} : vector<128x128xbf16>, vector<128x256xbf16>, vector<128x256xf32> -> vector<128x256xf32>
    %37 = arith.truncf %36 : vector<128x256xf32> to vector<128x256xbf16>
    %c0_36 = arith.constant 0 : index
    %c0_37 = arith.constant 0 : index
    %38 = vector.load %arg2[%c0_36, %c0_37] : memref<256x128xbf16, #tpu.memory_space<vmem>>, vector<256x128xbf16>
    %cst_38 = arith.constant dense<0.000000e+00> : vector<128x128xf32>
    %39 = tpu.matmul %37, %38, %cst_38 {dimension_numbers = #tpu.dot_dimension_numbers<[1], [0], [0], [1], [0, 0, 1, 1], [], []>} : vector<128x256xbf16>, vector<256x128xbf16>, vector<128x128xf32> -> vector<128x128xf32>
    %40 = arith.truncf %39 : vector<128x128xf32> to vector<128x128xbf16>
    %c0_39 = arith.constant 0 : index
    %c0_40 = arith.constant 0 : index
    %41 = vector.load %arg3[%c0_39, %c0_40] : memref<128x128xbf16, #tpu.memory_space<vmem>>, vector<128x128xbf16>
    %cst_41 = arith.constant dense<0.000000e+00> : vector<128x128xf32>
    %42 = tpu.matmul %40, %41, %cst_41 {dimension_numbers = #tpu.dot_dimension_numbers<[1], [0], [0], [1], [0, 0, 1, 1], [], []>} : vector<128x128xbf16>, vector<128x128xbf16>, vector<128x128xf32> -> vector<128x128xf32>
    %43 = arith.truncf %42 : vector<128x128xf32> to vector<128x128xbf16>
    %c0_42 = arith.constant 0 : index
    %c0_43 = arith.constant 0 : index
    %44 = vector.load %arg4[%c0_42, %c0_43] : memref<128x128xbf16, #tpu.memory_space<vmem>>, vector<128x128xbf16>
    %cst_44 = arith.constant dense<0.000000e+00> : vector<128x128xf32>
    %45 = tpu.matmul %43, %44, %cst_44 {dimension_numbers = #tpu.dot_dimension_numbers<[1], [0], [0], [1], [0, 0, 1, 1], [], []>} : vector<128x128xbf16>, vector<128x128xbf16>, vector<128x128xf32> -> vector<128x128xf32>
    %46 = arith.truncf %45 : vector<128x128xf32> to vector<128x128xbf16>
    %c0_45 = arith.constant 0 : index
    %c0_46 = arith.constant 0 : index
    %47 = vector.load %arg6[%c0_45, %c0_46] : memref<128x256xbf16, #tpu.memory_space<vmem>>, vector<128x256xbf16>
    %cst_47 = arith.constant dense<0.000000e+00> : vector<128x256xf32>
    %48 = tpu.matmul %46, %47, %cst_47 {dimension_numbers = #tpu.dot_dimension_numbers<[1], [0], [0], [1], [0, 0, 1, 1], [], []>} : vector<128x128xbf16>, vector<128x256xbf16>, vector<128x256xf32> -> vector<128x256xf32>
    %49 = vector.extract_strided_slice %48 {offsets = [0, 0], sizes = [128, 128], strides = [1, 1]} : vector<128x256xf32> to vector<128x128xf32>
    %c0_48 = arith.constant 0 : index
    %c0_49 = arith.constant 0 : index
    %50 = vector.load %arg7[%c0_48, %c0_49] : memref<1x128xf32, #tpu.memory_space<vmem>>, vector<1x128xf32>
    %51 = vector.broadcast %50 : vector<1x128xf32> to vector<128x128xf32>
    %52 = arith.addf %49, %51 : vector<128x128xf32>
    %53 = vector.extract_strided_slice %48 {offsets = [0, 128], sizes = [128, 128], strides = [1, 1]} : vector<128x256xf32> to vector<128x128xf32>
    %54 = arith.truncf %53 : vector<128x128xf32> to vector<128x128xbf16>
    %c0_50 = arith.constant 0 : index
    %c0_51 = arith.constant 0 : index
    %55 = vector.load %arg8[%c0_50, %c0_51] : memref<128x128xbf16, #tpu.memory_space<vmem>>, vector<128x128xbf16>
    %cst_52 = arith.constant dense<0.000000e+00> : vector<128x128xf32>
    %56 = tpu.matmul %54, %55, %cst_52 {dimension_numbers = #tpu.dot_dimension_numbers<[1], [0], [0], [1], [0, 0, 1, 1], [], []>} : vector<128x128xbf16>, vector<128x128xbf16>, vector<128x128xf32> -> vector<128x128xf32>
    %57 = arith.truncf %56 : vector<128x128xf32> to vector<128x128xbf16>
    %c0_53 = arith.constant 0 : index
    %c0_54 = arith.constant 0 : index
    %58 = vector.load %arg9[%c0_53, %c0_54] : memref<128x256xbf16, #tpu.memory_space<vmem>>, vector<128x256xbf16>
    %cst_55 = arith.constant dense<0.000000e+00> : vector<128x256xf32>
    %59 = tpu.matmul %57, %58, %cst_55 {dimension_numbers = #tpu.dot_dimension_numbers<[1], [0], [0], [1], [0, 0, 1, 1], [], []>} : vector<128x128xbf16>, vector<128x256xbf16>, vector<128x256xf32> -> vector<128x256xf32>
    %c0_56 = arith.constant 0 : index
    %c0_57 = arith.constant 0 : index
    %60 = vector.load %arg10[%c0_56, %c0_57] : memref<128x256xf32, #tpu.memory_space<vmem>>, vector<128x256xf32>
    tpu.vector_store %arg10[%c0_56, %c0_57], %59 {strides = array<i32>} : memref<128x256xf32, #tpu.memory_space<vmem>>, vector<128x256xf32>,
    %c0_58 = arith.constant 0 : index
    %c0_59 = arith.constant 0 : index
    %61 = vector.load %arg11[%c0_58, %c0_59] : memref<128x128xf32, #tpu.memory_space<vmem>>, vector<128x128xf32>
    tpu.vector_store %arg11[%c0_58, %c0_59], %52 {strides = array<i32>} : memref<128x128xf32, #tpu.memory_space<vmem>>, vector<128x128xf32>,
    return
  }
  func.func @transform_0(%arg0: i32) -> (i32, i32) {
    %c0_i32 = arith.constant 0 : i32
    %c0_i32_0 = arith.constant 0 : i32
    return %arg0, %c0_i32 : i32, i32
  }
  func.func @transform_1(%arg0: i32) -> (i32, i32) {
    %c0_i32 = arith.constant 0 : i32
    %c0_i32_0 = arith.constant 0 : i32
    %c0_i32_1 = arith.constant 0 : i32
    return %c0_i32, %c0_i32_0 : i32, i32
  }
  func.func @transform_2(%arg0: i32) -> (i32, i32) {
    %c0_i32 = arith.constant 0 : i32
    %c0_i32_0 = arith.constant 0 : i32
    %c0_i32_1 = arith.constant 0 : i32
    return %c0_i32, %c0_i32_0 : i32, i32
  }
  func.func @transform_3(%arg0: i32) -> (i32, i32) {
    %c0_i32 = arith.constant 0 : i32
    %c0_i32_0 = arith.constant 0 : i32
    %c0_i32_1 = arith.constant 0 : i32
    return %c0_i32, %c0_i32_0 : i32, i32
  }
  func.func @transform_4(%arg0: i32) -> (i32, i32) {
    %c0_i32 = arith.constant 0 : i32
    %c0_i32_0 = arith.constant 0 : i32
    %c0_i32_1 = arith.constant 0 : i32
    return %c0_i32, %c0_i32_0 : i32, i32
  }
  func.func @transform_5(%arg0: i32) -> (i32, i32) {
    %c0_i32 = arith.constant 0 : i32
    %c0_i32_0 = arith.constant 0 : i32
    %c0_i32_1 = arith.constant 0 : i32
    return %c0_i32, %c0_i32_0 : i32, i32
  }
  func.func @transform_6(%arg0: i32) -> (i32, i32) {
    %c0_i32 = arith.constant 0 : i32
    %c0_i32_0 = arith.constant 0 : i32
    %c0_i32_1 = arith.constant 0 : i32
    return %c0_i32, %c0_i32_0 : i32, i32
  }
  func.func @transform_7(%arg0: i32) -> (i32, i32) {
    %c0_i32 = arith.constant 0 : i32
    %c0_i32_0 = arith.constant 0 : i32
    %c0_i32_1 = arith.constant 0 : i32
    return %c0_i32, %c0_i32_0 : i32, i32
  }
  func.func @transform_8(%arg0: i32) -> (i32, i32) {
    %c0_i32 = arith.constant 0 : i32
    %c0_i32_0 = arith.constant 0 : i32
    %c0_i32_1 = arith.constant 0 : i32
    return %c0_i32, %c0_i32_0 : i32, i32
  }
  func.func @transform_9(%arg0: i32) -> (i32, i32) {
    %c0_i32 = arith.constant 0 : i32
    %c0_i32_0 = arith.constant 0 : i32
    return %arg0, %c0_i32 : i32, i32
  }
  func.func @transform_10(%arg0: i32) -> (i32, i32) {
    %c0_i32 = arith.constant 0 : i32
    %c0_i32_0 = arith.constant 0 : i32
    return %arg0, %c0_i32 : i32, i32
  }
}

</mosaic_0001>

<llo_original>
// kernel: tpu_custom_call.1
$region0: #{tpu_custom_call.1}
  #allocation0 [shape = 'u32[]', space=smem, size = 0x4, offset = 0x4, fixed_abs, tag = 'smem constant byte address 0x4 - core index']
  #allocation1 [shape = 'u32[144,128]{1,0:T(1,128)}', space=vmem, size = 0x12000, scoped, tag = 'internal scratch']
  %s0 = inlined_call_operand.hbm [shape: f32[128,256], index: 0, kind: input, shape index: {}]
  %s1 = inlined_call_operand.hbm [shape: bf16[256,128], index: 1, kind: input, shape index: {}]
  %s2 = inlined_call_operand.hbm [shape: bf16[128,128], index: 2, kind: input, shape index: {}]
  %s3 = inlined_call_operand.hbm [shape: bf16[128,128], index: 3, kind: input, shape index: {}]
  %s4 = inlined_call_operand.hbm [shape: bf16[128,128], index: 4, kind: input, shape index: {}]
  %s5 = inlined_call_operand.hbm [shape: bf16[128,256], index: 5, kind: input, shape index: {}]
  %s6 = inlined_call_operand.vmem [shape: f32[1,128], index: 6, kind: input, shape index: {}]
  %s7 = inlined_call_operand.hbm [shape: bf16[128,128], index: 7, kind: input, shape index: {}]
  %s8 = inlined_call_operand.hbm [shape: bf16[128,256], index: 8, kind: input, shape index: {}]
  %s9 = inlined_call_operand.hbm [shape: f32[128,256], index: 9, kind: output, shape index: {0}]
  %s10 = inlined_call_operand.hbm [shape: f32[128,128], index: 10, kind: output, shape index: {1}]
  %11 = xla_tuple %s9, %s10
  %s12 = sld [smem:[#allocation0]]
  $region86: #{tpu_custom_call.1} parent=0
    _
  %s14 = ssub.s32 1, %s12
  %s15 = scalar_select 0, %s14, %s12
  $region1: #{tpu_custom_call.1} parent=0
    #allocation2 [shape = 'u8[131072]{0}', space=vmem, size = 0x20000, scoped, tag = 'input window, operand 0, single buffered']
    #allocation3 [shape = 's32[1]{0}', space=sflag, size = 0x4, scoped, tag = 'scoped memory for tpu_custom_call.1']
    #allocation4 [shape = 's32[1]{0}', space=sflag, size = 0x4, scoped, tag = 'scoped memory for tpu_custom_call.1']
    #allocation5 [shape = 'u8[65536]{0}', space=vmem, size = 0x10000, scoped, tag = 'input window, operand 1, single buffered']
    #allocation6 [shape = 's32[1]{0}', space=sflag, size = 0x4, scoped, tag = 'scoped memory for tpu_custom_call.1']
    #allocation7 [shape = 'u8[32768]{0}', space=vmem, size = 0x8000, scoped, tag = 'input window, operand 2, single buffered']
    #allocation8 [shape = 'u8[32768]{0}', space=vmem, size = 0x8000, scoped, tag = 'input window, operand 3, single buffered']
    #allocation9 [shape = 's32[1]{0}', space=sflag, size = 0x4, scoped, tag = 'scoped memory for tpu_custom_call.1']
    #allocation10 [shape = 'u8[32768]{0}', space=vmem, size = 0x8000, scoped, tag = 'input window, operand 4, single buffered']
    #allocation11 [shape = 'u8[65536]{0}', space=vmem, size = 0x10000, scoped, tag = 'input window, operand 5, single buffered']
    #allocation12 [shape = 's32[1]{0}', space=sflag, size = 0x4, scoped, tag = 'scoped memory for tpu_custom_call.1']
    #allocation13 [shape = 'u8[32768]{0}', space=vmem, size = 0x8000, scoped, tag = 'input window, operand 7, single buffered']
    #allocation14 [shape = 'u8[65536]{0}', space=vmem, size = 0x10000, scoped, tag = 'input window, operand 8, single buffered']
    #allocation15 [shape = 's32[1]{0}', space=sflag, size = 0x4, scoped, tag = 'scoped memory for tpu_custom_call.1']
    #allocation16 [shape = 'u8[131072]{0}', space=vmem, size = 0x20000, scoped, tag = 'output window, operand 0, single buffered']
    #allocation17 [shape = 'u8[65536]{0}', space=vmem, size = 0x10000, scoped, tag = 'output window, operand 1, single buffered']
    #allocation18 [shape = 's32[1]{0}', space=sflag, size = 0x4, scoped, tag = 'scoped memory for tpu_custom_call.1']
    %16 = vsyncpa [#allocation3], 0
    %17 = vsyncpa [#allocation6], 0
    %18 = vsyncpa [#allocation9], 0
    %19 = vsyncpa [#allocation12], 0
    %20 = vsyncpa [#allocation15], 0
    %21 = vsyncpa [#allocation4], 0
    %22 = vsyncpa [#allocation18], 0
    // Predicated region
    $region2: #{tpu_custom_call.1} parent=1 // pred_check
      _
    $region3: #{tpu_custom_call.1} parent=1 // pred_check_branch
      %24 = sbr.rel (0) target = $region5
    $region4: #{tpu_custom_call.1} parent=1 // pred_region
      %s26 = ssub.s32 4096, 4096
      %27 = vsyncadd [#allocation3], %s26
      %s28 = sshll.u32 [#allocation2], 4
      %s29 = int_to_ptr.vmem [resolvable:$true] %s28
      %34 = dma.hbm_to_vmem [thread:$0]  %s0, 4096, %s29, [#allocation3], 256, 256, 16
    $region5: #{tpu_custom_call.1} parent=1 // pred_fallthru
      _
    // Predicated region
    $region6: #{tpu_custom_call.1} parent=1 // pred_check
      _
    $region7: #{tpu_custom_call.1} parent=1 // pred_check_branch
      %36 = sbr.rel (0) target = $region9
    $region8: #{tpu_custom_call.1} parent=1 // pred_region
      %s38 = ssub.s32 2048, 2048
      %39 = vsyncadd [#allocation6], %s38
      %s40 = sshll.u32 [#allocation5], 4
      %s41 = int_to_ptr.vmem [resolvable:$true] %s40
      %46 = dma.hbm_to_vmem [thread:$0]  %s1, 2048, %s41, [#allocation6], 64, 64, 4
    $region9: #{tpu_custom_call.1} parent=1 // pred_fallthru
      _
    // Predicated region
    $region10: #{tpu_custom_call.1} parent=1 // pred_check
      _
    $region11: #{tpu_custom_call.1} parent=1 // pred_check_branch
      %48 = sbr.rel (0) target = $region13
    $region12: #{tpu_custom_call.1} parent=1 // pred_region
      %s50 = ssub.s32 1024, 1024
      %51 = vsyncadd [#allocation6], %s50
      %s52 = sshll.u32 [#allocation7], 4
      %s53 = int_to_ptr.vmem [resolvable:$true] %s52
      %58 = dma.hbm_to_vmem [thread:$0]  %s2, 1024, %s53, [#allocation6], 64, 64, 4
    $region13: #{tpu_custom_call.1} parent=1 // pred_fallthru
      _
    // Predicated region
    $region14: #{tpu_custom_call.1} parent=1 // pred_check
      _
    $region15: #{tpu_custom_call.1} parent=1 // pred_check_branch
      %60 = sbr.rel (0) target = $region17
    $region16: #{tpu_custom_call.1} parent=1 // pred_region
      %s62 = ssub.s32 1024, 1024
      %63 = vsyncadd [#allocation9], %s62
      %s64 = sshll.u32 [#allocation8], 4
      %s65 = int_to_ptr.vmem [resolvable:$true] %s64
      %70 = dma.hbm_to_vmem [thread:$0]  %s3, 1024, %s65, [#allocation9], 64, 64, 4
    $region17: #{tpu_custom_call.1} parent=1 // pred_fallthru
      _
    // Predicated region
    $region18: #{tpu_custom_call.1} parent=1 // pred_check
      _
    $region19: #{tpu_custom_call.1} parent=1 // pred_check_branch
      %72 = sbr.rel (0) target = $region21
    $region20: #{tpu_custom_call.1} parent=1 // pred_region
      %s74 = ssub.s32 1024, 1024
      %75 = vsyncadd [#allocation9], %s74
      %s76 = sshll.u32 [#allocation10], 4
      %s77 = int_to_ptr.vmem [resolvable:$true] %s76
      %82 = dma.hbm_to_vmem [thread:$0]  %s4, 1024, %s77, [#allocation9], 64, 64, 4
    $region21: #{tpu_custom_call.1} parent=1 // pred_fallthru
      _
    // Predicated region
    $region22: #{tpu_custom_call.1} parent=1 // pred_check
      _
    $region23: #{tpu_custom_call.1} parent=1 // pred_check_branch
      %84 = sbr.rel (0) target = $region25
    $region24: #{tpu_custom_call.1} parent=1 // pred_region
      %s86 = ssub.s32 2048, 2048
      %87 = vsyncadd [#allocation12], %s86
      %s88 = sshll.u32 [#allocation11], 4
      %s89 = int_to_ptr.vmem [resolvable:$true] %s88
      %94 = dma.hbm_to_vmem [thread:$0]  %s5, 2048, %s89, [#allocation12], 128, 128, 8
    $region25: #{tpu_custom_call.1} parent=1 // pred_fallthru
      _
    // Predicated region
    $region26: #{tpu_custom_call.1} parent=1 // pred_check
      _
    $region27: #{tpu_custom_call.1} parent=1 // pred_check_branch
      %96 = sbr.rel (0) target = $region29
    $region28: #{tpu_custom_call.1} parent=1 // pred_region
      _
    $region29: #{tpu_custom_call.1} parent=1 // pred_fallthru
      _
    // Predicated region
    $region30: #{tpu_custom_call.1} parent=1 // pred_check
      _
    $region31: #{tpu_custom_call.1} parent=1 // pred_check_branch
      %98 = sbr.rel (0) target = $region33
    $region32: #{tpu_custom_call.1} parent=1 // pred_region
      %s100 = ssub.s32 1024, 1024
      %101 = vsyncadd [#allocation12], %s100
      %s102 = sshll.u32 [#allocation13], 4
      %s103 = int_to_ptr.vmem [resolvable:$true] %s102
      %108 = dma.hbm_to_vmem [thread:$0]  %s7, 1024, %s103, [#allocation12], 64, 64, 4
    $region33: #{tpu_custom_call.1} parent=1 // pred_fallthru
      _
    // Predicated region
    $region34: #{tpu_custom_call.1} parent=1 // pred_check
      _
    $region35: #{tpu_custom_call.1} parent=1 // pred_check_branch
      %110 = sbr.rel (0) target = $region37
    $region36: #{tpu_custom_call.1} parent=1 // pred_region
      %s112 = ssub.s32 2048, 2048
      %113 = vsyncadd [#allocation15], %s112
      %s114 = sshll.u32 [#allocation14], 4
      %s115 = int_to_ptr.vmem [resolvable:$true] %s114
      %120 = dma.hbm_to_vmem [thread:$0]  %s8, 2048, %s115, [#allocation15], 128, 128, 8
    $region37: #{tpu_custom_call.1} parent=1 // pred_fallthru
      _
    // Predicated region
    $region38: #{tpu_custom_call.1} parent=1 // pred_check
      _
    $region39: #{tpu_custom_call.1} parent=1 // pred_check_branch
      %122 = sbr.rel (0) target = $region41
    $region40: #{tpu_custom_call.1} parent=1 // pred_region
      %123 = dma.done [#allocation3], 4096
    $region41: #{tpu_custom_call.1} parent=1 // pred_fallthru
      _
    // Predicated region
    $region42: #{tpu_custom_call.1} parent=1 // pred_check
      _
    $region43: #{tpu_custom_call.1} parent=1 // pred_check_branch
      %125 = sbr.rel (0) target = $region45
    $region44: #{tpu_custom_call.1} parent=1 // pred_region
      %126 = dma.done [#allocation6], 2048
    $region45: #{tpu_custom_call.1} parent=1 // pred_fallthru
      _
    // Predicated region
    $region46: #{tpu_custom_call.1} parent=1 // pred_check
      _
    $region47: #{tpu_custom_call.1} parent=1 // pred_check_branch
      %128 = sbr.rel (0) target = $region49
    $region48: #{tpu_custom_call.1} parent=1 // pred_region
      %129 = dma.done [#allocation6], 1024
    $region49: #{tpu_custom_call.1} parent=1 // pred_fallthru
      _
    // Predicated region
    $region50: #{tpu_custom_call.1} parent=1 // pred_check
      _
    $region51: #{tpu_custom_call.1} parent=1 // pred_check_branch
      %131 = sbr.rel (0) target = $region53
    $region52: #{tpu_custom_call.1} parent=1 // pred_region
      %132 = dma.done [#allocation9], 1024
    $region53: #{tpu_custom_call.1} parent=1 // pred_fallthru
      _
    // Predicated region
    $region54: #{tpu_custom_call.1} parent=1 // pred_check
      _
    $region55: #{tpu_custom_call.1} parent=1 // pred_check_branch
      %134 = sbr.rel (0) target = $region57
    $region56: #{tpu_custom_call.1} parent=1 // pred_region
      %135 = dma.done [#allocation9], 1024
    $region57: #{tpu_custom_call.1} parent=1 // pred_fallthru
      _
    // Predicated region
    $region58: #{tpu_custom_call.1} parent=1 // pred_check
      _
    $region59: #{tpu_custom_call.1} parent=1 // pred_check_branch
      %137 = sbr.rel (0) target = $region61
    $region60: #{tpu_custom_call.1} parent=1 // pred_region
      %138 = dma.done [#allocation12], 2048
    $region61: #{tpu_custom_call.1} parent=1 // pred_fallthru
      _
    // Predicated region
    $region62: #{tpu_custom_call.1} parent=1 // pred_check
      _
    $region63: #{tpu_custom_call.1} parent=1 // pred_check_branch
      %140 = sbr.rel (0) target = $region65
    $region64: #{tpu_custom_call.1} parent=1 // pred_region
      %141 = dma.done [#allocation12], 1024
    $region65: #{tpu_custom_call.1} parent=1 // pred_fallthru
      _
    // Predicated region
    $region66: #{tpu_custom_call.1} parent=1 // pred_check
      _
    $region67: #{tpu_custom_call.1} parent=1 // pred_check_branch
      %143 = sbr.rel (0) target = $region69
    $region68: #{tpu_custom_call.1} parent=1 // pred_region
      %144 = dma.done [#allocation15], 2048
    $region69: #{tpu_custom_call.1} parent=1 // pred_fallthru
      _
    %v146 = vld [vmem:[#allocation2] sm:$0xff]
    %v147 = vld [vmem:[#allocation2 + $0x8] sm:$0xff]
    %v148 = vld [vmem:[#allocation2 + $0x10] sm:$0xff]
    %v149 = vld [vmem:[#allocation2 + $0x18] sm:$0xff]
    %v150 = vld [vmem:[#allocation2 + $0x20] sm:$0xff]
    %v151 = vld [vmem:[#allocation2 + $0x28] sm:$0xff]
    %v152 = vld [vmem:[#allocation2 + $0x30] sm:$0xff]
    %v153 = vld [vmem:[#allocation2 + $0x38] sm:$0xff]
    %v154 = vld [vmem:[#allocation2 + $0x40] sm:$0xff]
    %v155 = vld [vmem:[#allocation2 + $0x48] sm:$0xff]
    %v156 = vld [vmem:[#allocation2 + $0x50] sm:$0xff]
    %v157 = vld [vmem:[#allocation2 + $0x58] sm:$0xff]
    %v158 = vld [vmem:[#allocation2 + $0x60] sm:$0xff]
    %v159 = vld [vmem:[#allocation2 + $0x68] sm:$0xff]
    %v160 = vld [vmem:[#allocation2 + $0x70] sm:$0xff]
    %v161 = vld [vmem:[#allocation2 + $0x78] sm:$0xff]
    %v162 = vld [vmem:[#allocation2 + $0x80] sm:$0xff]
    %v163 = vld [vmem:[#allocation2 + $0x88] sm:$0xff]
    %v164 = vld [vmem:[#allocation2 + $0x90] sm:$0xff]
    %v165 = vld [vmem:[#allocation2 + $0x98] sm:$0xff]
    %v166 = vld [vmem:[#allocation2 + $0xa0] sm:$0xff]
    %v167 = vld [vmem:[#allocation2 + $0xa8] sm:$0xff]
    %v168 = vld [vmem:[#allocation2 + $0xb0] sm:$0xff]
    %v169 = vld [vmem:[#allocation2 + $0xb8] sm:$0xff]
    %v170 = vld [vmem:[#allocation2 + $0xc0] sm:$0xff]
    %v171 = vld [vmem:[#allocation2 + $0xc8] sm:$0xff]
    %v172 = vld [vmem:[#allocation2 + $0xd0] sm:$0xff]
    %v173 = vld [vmem:[#allocation2 + $0xd8] sm:$0xff]
    %v174 = vld [vmem:[#allocation2 + $0xe0] sm:$0xff]
    %v175 = vld [vmem:[#allocation2 + $0xe8] sm:$0xff]
    %v176 = vld [vmem:[#allocation2 + $0xf0] sm:$0xff]
    %v177 = vld [vmem:[#allocation2 + $0xf8] sm:$0xff]
    %v178 = vpack.c.bf16 %v148, %v146
    %v179 = vpack.c.bf16 %v149, %v147
    %v180 = vpack.c.bf16 %v152, %v150
    %v181 = vpack.c.bf16 %v153, %v151
    %v182 = vpack.c.bf16 %v156, %v154
    %v183 = vpack.c.bf16 %v157, %v155
    %v184 = vpack.c.bf16 %v160, %v158
    %v185 = vpack.c.bf16 %v161, %v159
    %v186 = vpack.c.bf16 %v164, %v162
    %v187 = vpack.c.bf16 %v165, %v163
    %v188 = vpack.c.bf16 %v168, %v166
    %v189 = vpack.c.bf16 %v169, %v167
    %v190 = vpack.c.bf16 %v172, %v170
    %v191 = vpack.c.bf16 %v173, %v171
    %v192 = vpack.c.bf16 %v176, %v174
    %v193 = vpack.c.bf16 %v177, %v175
    %v194 = vld [vmem:[#allocation5] sm:$0xf]
    %v195 = vld [vmem:[#allocation5 + $0x4] sm:$0xf]
    %v196 = vld [vmem:[#allocation5 + $0x8] sm:$0xf]
    %v197 = vld [vmem:[#allocation5 + $0xc] sm:$0xf]
    %v198 = vld [vmem:[#allocation5 + $0x10] sm:$0xf]
    %v199 = vld [vmem:[#allocation5 + $0x14] sm:$0xf]
    %v200 = vld [vmem:[#allocation5 + $0x18] sm:$0xf]
    %v201 = vld [vmem:[#allocation5 + $0x1c] sm:$0xf]
    %v202 = vld [vmem:[#allocation5 + $0x20] sm:$0xf]
    %v203 = vld [vmem:[#allocation5 + $0x24] sm:$0xf]
    %v204 = vld [vmem:[#allocation5 + $0x28] sm:$0xf]
    %v205 = vld [vmem:[#allocation5 + $0x2c] sm:$0xf]
    %v206 = vld [vmem:[#allocation5 + $0x30] sm:$0xf]
    %v207 = vld [vmem:[#allocation5 + $0x34] sm:$0xf]
    %v208 = vld [vmem:[#allocation5 + $0x38] sm:$0xf]
    %v209 = vld [vmem:[#allocation5 + $0x3c] sm:$0xf]
    %v210 = vld [vmem:[#allocation5 + $0x40] sm:$0xf]
    %v211 = vld [vmem:[#allocation5 + $0x44] sm:$0xf]
    %v212 = vld [vmem:[#allocation5 + $0x48] sm:$0xf]
    %v213 = vld [vmem:[#allocation5 + $0x4c] sm:$0xf]
    %v214 = vld [vmem:[#allocation5 + $0x50] sm:$0xf]
    %v215 = vld [vmem:[#allocation5 + $0x54] sm:$0xf]
    %v216 = vld [vmem:[#allocation5 + $0x58] sm:$0xf]
    %v217 = vld [vmem:[#allocation5 + $0x5c] sm:$0xf]
    %v218 = vld [vmem:[#allocation5 + $0x60] sm:$0xf]
    %v219 = vld [vmem:[#allocation5 + $0x64] sm:$0xf]
    %v220 = vld [vmem:[#allocation5 + $0x68] sm:$0xf]
    %v221 = vld [vmem:[#allocation5 + $0x6c] sm:$0xf]
    %v222 = vld [vmem:[#allocation5 + $0x70] sm:$0xf]
    %v223 = vld [vmem:[#allocation5 + $0x74] sm:$0xf]
    %v224 = vld [vmem:[#allocation5 + $0x78] sm:$0xf]
    %v225 = vld [vmem:[#allocation5 + $0x7c] sm:$0xf]
    %v258 = vunpack.c.l.b16 %v194
    %v259 = vunpack.c.l.b16 %v195
    %v260 = vunpack.c.l.b16 %v196
    %v261 = vunpack.c.l.b16 %v197
    %v262 = vunpack.c.l.b16 %v198
    %v263 = vunpack.c.l.b16 %v199
    %v264 = vunpack.c.l.b16 %v200
    %v265 = vunpack.c.l.b16 %v201
    %v266 = vunpack.c.l.b16 %v202
    %v267 = vunpack.c.l.b16 %v203
    %v268 = vunpack.c.l.b16 %v204
    %v269 = vunpack.c.l.b16 %v205
    %v270 = vunpack.c.l.b16 %v206
    %v271 = vunpack.c.l.b16 %v207
    %v272 = vunpack.c.l.b16 %v208
    %v273 = vunpack.c.l.b16 %v209
    %v274 = vunpack.c.l.b16 %v210
    %v275 = vunpack.c.l.b16 %v211
    %v276 = vunpack.c.l.b16 %v212
    %v277 = vunpack.c.l.b16 %v213
    %v278 = vunpack.c.l.b16 %v214
    %v279 = vunpack.c.l.b16 %v215
    %v280 = vunpack.c.l.b16 %v216
    %v281 = vunpack.c.l.b16 %v217
    %v282 = vunpack.c.l.b16 %v218
    %v283 = vunpack.c.l.b16 %v219
    %v284 = vunpack.c.l.b16 %v220
    %v285 = vunpack.c.l.b16 %v221
    %v286 = vunpack.c.l.b16 %v222
    %v287 = vunpack.c.l.b16 %v223
    %v288 = vunpack.c.l.b16 %v224
    %v289 = vunpack.c.l.b16 %v225
    %v290 = vpack.c.b16 %v259, %v258
    %v291 = vpack.c.b16 %v261, %v260
    %v292 = vpack.c.b16 %v263, %v262
    %v293 = vpack.c.b16 %v265, %v264
    %v294 = vpack.c.b16 %v267, %v266
    %v295 = vpack.c.b16 %v269, %v268
    %v296 = vpack.c.b16 %v271, %v270
    %v297 = vpack.c.b16 %v273, %v272
    %v298 = vpack.c.b16 %v275, %v274
    %v299 = vpack.c.b16 %v277, %v276
    %v300 = vpack.c.b16 %v279, %v278
    %v301 = vpack.c.b16 %v281, %v280
    %v302 = vpack.c.b16 %v283, %v282
    %v303 = vpack.c.b16 %v285, %v284
    %v304 = vpack.c.b16 %v287, %v286
    %v305 = vpack.c.b16 %v289, %v288
    %322 = vmatprep.subr.bf16.mxu0 0
    %323 = vmatpush1.bf16.msra.mxu0 %v297
    %324 = vmatprep.subr.bf16.mxu0 0
    %325 = vmatpush1.bf16.msra.mxu0 %v296
    %326 = vmatprep.subr.bf16.mxu0 0
    %327 = vmatpush1.bf16.msra.mxu0 %v295
    %328 = vmatprep.subr.bf16.mxu0 0
    %329 = vmatpush1.bf16.msra.mxu0 %v294
    %330 = vmatprep.subr.bf16.mxu0 0
    %331 = vmatpush1.bf16.msra.mxu0 %v293
    %332 = vmatprep.subr.bf16.mxu0 0
    %333 = vmatpush1.bf16.msra.mxu0 %v292
    %334 = vmatprep.subr.bf16.mxu0 0
    %335 = vmatpush1.bf16.msra.mxu0 %v291
    %336 = vmatprep.subr.bf16.mxu0 0
    %337 = vmatpush1.bf16.msra.mxu0 %v290
    %338 = vmatprep.subr.bf16.mxu0 0
    %339 = vmatpush2.bf16.msra.mxu0 %v305
    %340 = vmatprep.subr.bf16.mxu0 0
    %341 = vmatpush2.bf16.msra.mxu0 %v304
    %342 = vmatprep.subr.bf16.mxu0 0
    %343 = vmatpush2.bf16.msra.mxu0 %v303
    %344 = vmatprep.subr.bf16.mxu0 0
    %345 = vmatpush2.bf16.msra.mxu0 %v302
    %346 = vmatprep.subr.bf16.mxu0 0
    %347 = vmatpush2.bf16.msra.mxu0 %v301
    %348 = vmatprep.subr.bf16.mxu0 0
    %349 = vmatpush2.bf16.msra.mxu0 %v300
    %350 = vmatprep.subr.bf16.mxu0 0
    %351 = vmatpush2.bf16.msra.mxu0 %v299
    %352 = vmatprep.subr.bf16.mxu0 0
    %353 = vmatpush2.bf16.msra.mxu0 %v298
    %354 = vmatprep.mubr.bf16.mxu0 %v179
    %355 = vmatmul.mubr.bf16.gmra.mxu0 %v178
    %v356 = vpop.f32.mrf.mxu0
    %v357 = vadd.f32 0.0, %v356
    %v358 = vpop.f32.mrf.mxu0
    %v359 = vpop.f32.mrf.mxu0
    %v360 = vadd.f32 0.0, %v359
    %v361 = vpop.f32.mrf.mxu0
    %362 = vmatprep.mubr.bf16.mxu0 %v181
    %363 = vmatmul.mubr.bf16.gmra.mxu0 %v180
    %v364 = vpop.f32.mrf.mxu0
    %v365 = vadd.f32 0.0, %v364
    %v366 = vpop.f32.mrf.mxu0
    %v367 = vpop.f32.mrf.mxu0
    %v368 = vadd.f32 0.0, %v367
    %v369 = vpop.f32.mrf.mxu0
    %370 = vmatprep.mubr.bf16.mxu0 %v183
    %371 = vmatmul.mubr.bf16.gmra.mxu0 %v182
    %v372 = vpop.f32.mrf.mxu0
    %v373 = vadd.f32 0.0, %v372
    %v374 = vpop.f32.mrf.mxu0
    %v375 = vpop.f32.mrf.mxu0
    %v376 = vadd.f32 0.0, %v375
    %v377 = vpop.f32.mrf.mxu0
    %378 = vmatprep.mubr.bf16.mxu0 %v185
    %379 = vmatmul.mubr.bf16.gmra.mxu0 %v184
    %v380 = vpop.f32.mrf.mxu0
    %v381 = vadd.f32 0.0, %v380
    %v382 = vpop.f32.mrf.mxu0
    %v383 = vpop.f32.mrf.mxu0
    %v384 = vadd.f32 0.0, %v383
    %v385 = vpop.f32.mrf.mxu0
    %386 = vmatprep.mubr.bf16.mxu0 %v187
    %387 = vmatmul.mubr.bf16.gmra.mxu0 %v186
    %v388 = vpop.f32.mrf.mxu0
    %v389 = vadd.f32 0.0, %v388
    %v390 = vpop.f32.mrf.mxu0
    %v391 = vpop.f32.mrf.mxu0
    %v392 = vadd.f32 0.0, %v391
    %v393 = vpop.f32.mrf.mxu0
    %394 = vmatprep.mubr.bf16.mxu0 %v189
    %395 = vmatmul.mubr.bf16.gmra.mxu0 %v188
    %v396 = vpop.f32.mrf.mxu0
    %v397 = vadd.f32 0.0, %v396
    %v398 = vpop.f32.mrf.mxu0
    %v399 = vpop.f32.mrf.mxu0
    %v400 = vadd.f32 0.0, %v399
    %v401 = vpop.f32.mrf.mxu0
    %402 = vmatprep.mubr.bf16.mxu0 %v191
    %403 = vmatmul.mubr.bf16.gmra.mxu0 %v190
    %v404 = vpop.f32.mrf.mxu0
    %v405 = vadd.f32 0.0, %v404
    %v406 = vpop.f32.mrf.mxu0
    %v407 = vpop.f32.mrf.mxu0
    %v408 = vadd.f32 0.0, %v407
    %v409 = vpop.f32.mrf.mxu0
    %410 = vmatprep.mubr.bf16.mxu0 %v193
    %411 = vmatmul.mubr.bf16.gmra.mxu0 %v192
    %v412 = vpop.f32.mrf.mxu0
    %v413 = vadd.f32 0.0, %v412
    %v414 = vpop.f32.mrf.mxu0
    %v415 = vpop.f32.mrf.mxu0
    %v416 = vadd.f32 0.0, %v415
    %v417 = vpop.f32.mrf.mxu0
    %418 = vdwg.mxu0
    %v419 = vpack.c.bf16 %v360, %v357
    %v420 = vpack.c.bf16 %v368, %v365
    %v421 = vpack.c.bf16 %v376, %v373
    %v422 = vpack.c.bf16 %v384, %v381
    %v423 = vpack.c.bf16 %v392, %v389
    %v424 = vpack.c.bf16 %v400, %v397
    %v425 = vpack.c.bf16 %v408, %v405
    %v426 = vpack.c.bf16 %v416, %v413
    %v427 = vld [vmem:[#allocation7] sm:$0xf]
    %v428 = vld [vmem:[#allocation7 + $0x4] sm:$0xf]
    %v429 = vld [vmem:[#allocation7 + $0x8] sm:$0xf]
    %v430 = vld [vmem:[#allocation7 + $0xc] sm:$0xf]
    %v431 = vld [vmem:[#allocation7 + $0x10] sm:$0xf]
    %v432 = vld [vmem:[#allocation7 + $0x14] sm:$0xf]
    %v433 = vld [vmem:[#allocation7 + $0x18] sm:$0xf]
    %v434 = vld [vmem:[#allocation7 + $0x1c] sm:$0xf]
    %v435 = vld [vmem:[#allocation7 + $0x20] sm:$0xf]
    %v436 = vld [vmem:[#allocation7 + $0x24] sm:$0xf]
    %v437 = vld [vmem:[#allocation7 + $0x28] sm:$0xf]
    %v438 = vld [vmem:[#allocation7 + $0x2c] sm:$0xf]
    %v439 = vld [vmem:[#allocation7 + $0x30] sm:$0xf]
    %v440 = vld [vmem:[#allocation7 + $0x34] sm:$0xf]
    %v441 = vld [vmem:[#allocation7 + $0x38] sm:$0xf]
    %v442 = vld [vmem:[#allocation7 + $0x3c] sm:$0xf]
    %v459 = vunpack.c.l.b16 %v427
    %v460 = vunpack.c.l.b16 %v428
    %v461 = vunpack.c.l.b16 %v429
    %v462 = vunpack.c.l.b16 %v430
    %v463 = vunpack.c.l.b16 %v431
    %v464 = vunpack.c.l.b16 %v432
    %v465 = vunpack.c.l.b16 %v433
    %v466 = vunpack.c.l.b16 %v434
    %v467 = vunpack.c.l.b16 %v435
    %v468 = vunpack.c.l.b16 %v436
    %v469 = vunpack.c.l.b16 %v437
    %v470 = vunpack.c.l.b16 %v438
    %v471 = vunpack.c.l.b16 %v439
    %v472 = vunpack.c.l.b16 %v440
    %v473 = vunpack.c.l.b16 %v441
    %v474 = vunpack.c.l.b16 %v442
    %v475 = vpack.c.b16 %v460, %v459
    %v476 = vpack.c.b16 %v462, %v461
    %v477 = vpack.c.b16 %v464, %v463
    %v478 = vpack.c.b16 %v466, %v465
    %v479 = vpack.c.b16 %v468, %v467
    %v480 = vpack.c.b16 %v470, %v469
    %v481 = vpack.c.b16 %v472, %v471
    %v482 = vpack.c.b16 %v474, %v473
    %491 = vmatprep.subr.bf16.mxu0 0
    %492 = vmatpush1.bf16.msra.mxu0 %v482
    %493 = vmatprep.subr.bf16.mxu0 0
    %494 = vmatpush1.bf16.msra.mxu0 %v481
    %495 = vmatprep.subr.bf16.mxu0 0
    %496 = vmatpush1.bf16.msra.mxu0 %v480
    %497 = vmatprep.subr.bf16.mxu0 0
    %498 = vmatpush1.bf16.msra.mxu0 %v479
    %499 = vmatprep.subr.bf16.mxu0 0
    %500 = vmatpush1.bf16.msra.mxu0 %v478
    %501 = vmatprep.subr.bf16.mxu0 0
    %502 = vmatpush1.bf16.msra.mxu0 %v477
    %503 = vmatprep.subr.bf16.mxu0 0
    %504 = vmatpush1.bf16.msra.mxu0 %v476
    %505 = vmatprep.subr.bf16.mxu0 0
    %506 = vmatpush1.bf16.msra.mxu0 %v475
    %507 = vmatprep.subr.bf16.mxu0 0
    %508 = vmatpush2.bf16.msra.mxu0 0
    %509 = vmatprep.subr.bf16.mxu0 0
    %510 = vmatpush2.bf16.msra.mxu0 0
    %511 = vmatprep.subr.bf16.mxu0 0
    %512 = vmatpush2.bf16.msra.mxu0 0
    %513 = vmatprep.subr.bf16.mxu0 0
    %514 = vmatpush2.bf16.msra.mxu0 0
    %515 = vmatprep.subr.bf16.mxu0 0
    %516 = vmatpush2.bf16.msra.mxu0 0
    %517 = vmatprep.subr.bf16.mxu0 0
    %518 = vmatpush2.bf16.msra.mxu0 0
    %519 = vmatprep.subr.bf16.mxu0 0
    %520 = vmatpush2.bf16.msra.mxu0 0
    %521 = vmatprep.subr.bf16.mxu0 0
    %522 = vmatpush2.bf16.msra.mxu0 0
    %523 = vmatprep.mubr.bf16.mxu0 0
    %524 = vmatmul.mubr.bf16.gmra.mxu0 %v419
    %v525 = vpop.f32.mrf.mxu0
    %v526 = vadd.f32 0.0, %v525
    %v527 = vpop.f32.mrf.mxu0
    %v528 = vpop.f32.mrf.mxu0
    %v529 = vadd.f32 0.0, %v528
    %v530 = vpop.f32.mrf.mxu0
    %531 = vmatprep.mubr.bf16.mxu0 0
    %532 = vmatmul.mubr.bf16.gmra.mxu0 %v420
    %v533 = vpop.f32.mrf.mxu0
    %v534 = vadd.f32 0.0, %v533
    %v535 = vpop.f32.mrf.mxu0
    %v536 = vpop.f32.mrf.mxu0
    %v537 = vadd.f32 0.0, %v536
    %v538 = vpop.f32.mrf.mxu0
    %539 = vmatprep.mubr.bf16.mxu0 0
    %540 = vmatmul.mubr.bf16.gmra.mxu0 %v421
    %v541 = vpop.f32.mrf.mxu0
    %v542 = vadd.f32 0.0, %v541
    %v543 = vpop.f32.mrf.mxu0
    %v544 = vpop.f32.mrf.mxu0
    %v545 = vadd.f32 0.0, %v544
    %v546 = vpop.f32.mrf.mxu0
    %547 = vmatprep.mubr.bf16.mxu0 0
    %548 = vmatmul.mubr.bf16.gmra.mxu0 %v422
    %v549 = vpop.f32.mrf.mxu0
    %v550 = vadd.f32 0.0, %v549
    %v551 = vpop.f32.mrf.mxu0
    %v552 = vpop.f32.mrf.mxu0
    %v553 = vadd.f32 0.0, %v552
    %v554 = vpop.f32.mrf.mxu0
    %555 = vmatprep.mubr.bf16.mxu0 0
    %556 = vmatmul.mubr.bf16.gmra.mxu0 %v423
    %v557 = vpop.f32.mrf.mxu0
    %v558 = vadd.f32 0.0, %v557
    %v559 = vpop.f32.mrf.mxu0
    %v560 = vpop.f32.mrf.mxu0
    %v561 = vadd.f32 0.0, %v560
    %v562 = vpop.f32.mrf.mxu0
    %563 = vmatprep.mubr.bf16.mxu0 0
    %564 = vmatmul.mubr.bf16.gmra.mxu0 %v424
    %v565 = vpop.f32.mrf.mxu0
    %v566 = vadd.f32 0.0, %v565
    %v567 = vpop.f32.mrf.mxu0
    %v568 = vpop.f32.mrf.mxu0
    %v569 = vadd.f32 0.0, %v568
    %v570 = vpop.f32.mrf.mxu0
    %571 = vmatprep.mubr.bf16.mxu0 0
    %572 = vmatmul.mubr.bf16.gmra.mxu0 %v425
    %v573 = vpop.f32.mrf.mxu0
    %v574 = vadd.f32 0.0, %v573
    %v575 = vpop.f32.mrf.mxu0
    %v576 = vpop.f32.mrf.mxu0
    %v577 = vadd.f32 0.0, %v576
    %v578 = vpop.f32.mrf.mxu0
    %579 = vmatprep.mubr.bf16.mxu0 0
    %580 = vmatmul.mubr.bf16.gmra.mxu0 %v426
    %v581 = vpop.f32.mrf.mxu0
    %v582 = vadd.f32 0.0, %v581
    %v583 = vpop.f32.mrf.mxu0
    %v584 = vpop.f32.mrf.mxu0
    %v585 = vadd.f32 0.0, %v584
    %v586 = vpop.f32.mrf.mxu0
    %587 = vdwg.mxu0
    %v588 = vpack.c.bf16 %v529, %v526
    %v589 = vpack.c.bf16 %v537, %v534
    %v590 = vpack.c.bf16 %v545, %v542
    %v591 = vpack.c.bf16 %v553, %v550
    %v592 = vpack.c.bf16 %v561, %v558
    %v593 = vpack.c.bf16 %v569, %v566
    %v594 = vpack.c.bf16 %v577, %v574
    %v595 = vpack.c.bf16 %v585, %v582
    %v596 = vld [vmem:[#allocation8] sm:$0xf]
    %v597 = vld [vmem:[#allocation8 + $0x4] sm:$0xf]
    %v598 = vld [vmem:[#allocation8 + $0x8] sm:$0xf]
    %v599 = vld [vmem:[#allocation8 + $0xc] sm:$0xf]
    %v600 = vld [vmem:[#allocation8 + $0x10] sm:$0xf]
    %v601 = vld [vmem:[#allocation8 + $0x14] sm:$0xf]
    %v602 = vld [vmem:[#allocation8 + $0x18] sm:$0xf]
    %v603 = vld [vmem:[#allocation8 + $0x1c] sm:$0xf]
    %v604 = vld [vmem:[#allocation8 + $0x20] sm:$0xf]
    %v605 = vld [vmem:[#allocation8 + $0x24] sm:$0xf]
    %v606 = vld [vmem:[#allocation8 + $0x28] sm:$0xf]
    %v607 = vld [vmem:[#allocation8 + $0x2c] sm:$0xf]
    %v608 = vld [vmem:[#allocation8 + $0x30] sm:$0xf]
    %v609 = vld [vmem:[#allocation8 + $0x34] sm:$0xf]
    %v610 = vld [vmem:[#allocation8 + $0x38] sm:$0xf]
    %v611 = vld [vmem:[#allocation8 + $0x3c] sm:$0xf]
    %v628 = vunpack.c.l.b16 %v596
    %v629 = vunpack.c.l.b16 %v597
    %v630 = vunpack.c.l.b16 %v598
    %v631 = vunpack.c.l.b16 %v599
    %v632 = vunpack.c.l.b16 %v600
    %v633 = vunpack.c.l.b16 %v601
    %v634 = vunpack.c.l.b16 %v602
    %v635 = vunpack.c.l.b16 %v603
    %v636 = vunpack.c.l.b16 %v604
    %v637 = vunpack.c.l.b16 %v605
    %v638 = vunpack.c.l.b16 %v606
    %v639 = vunpack.c.l.b16 %v607
    %v640 = vunpack.c.l.b16 %v608
    %v641 = vunpack.c.l.b16 %v609
    %v642 = vunpack.c.l.b16 %v610
    %v643 = vunpack.c.l.b16 %v611
    %v644 = vpack.c.b16 %v629, %v628
    %v645 = vpack.c.b16 %v631, %v630
    %v646 = vpack.c.b16 %v633, %v632
    %v647 = vpack.c.b16 %v635, %v634
    %v648 = vpack.c.b16 %v637, %v636
    %v649 = vpack.c.b16 %v639, %v638
    %v650 = vpack.c.b16 %v641, %v640
    %v651 = vpack.c.b16 %v643, %v642
    %660 = vmatprep.subr.bf16.mxu0 0
    %661 = vmatpush1.bf16.msra.mxu0 %v651
    %662 = vmatprep.subr.bf16.mxu0 0
    %663 = vmatpush1.bf16.msra.mxu0 %v650
    %664 = vmatprep.subr.bf16.mxu0 0
    %665 = vmatpush1.bf16.msra.mxu0 %v649
    %666 = vmatprep.subr.bf16.mxu0 0
    %667 = vmatpush1.bf16.msra.mxu0 %v648
    %668 = vmatprep.subr.bf16.mxu0 0
    %669 = vmatpush1.bf16.msra.mxu0 %v647
    %670 = vmatprep.subr.bf16.mxu0 0
    %671 = vmatpush1.bf16.msra.mxu0 %v646
    %672 = vmatprep.subr.bf16.mxu0 0
    %673 = vmatpush1.bf16.msra.mxu0 %v645
    %674 = vmatprep.subr.bf16.mxu0 0
    %675 = vmatpush1.bf16.msra.mxu0 %v644
    %676 = vmatprep.subr.bf16.mxu0 0
    %677 = vmatpush2.bf16.msra.mxu0 0
    %678 = vmatprep.subr.bf16.mxu0 0
    %679 = vmatpush2.bf16.msra.mxu0 0
    %680 = vmatprep.subr.bf16.mxu0 0
    %681 = vmatpush2.bf16.msra.mxu0 0
    %682 = vmatprep.subr.bf16.mxu0 0
    %683 = vmatpush2.bf16.msra.mxu0 0
    %684 = vmatprep.subr.bf16.mxu0 0
    %685 = vmatpush2.bf16.msra.mxu0 0
    %686 = vmatprep.subr.bf16.mxu0 0
    %687 = vmatpush2.bf16.msra.mxu0 0
    %688 = vmatprep.subr.bf16.mxu0 0
    %689 = vmatpush2.bf16.msra.mxu0 0
    %690 = vmatprep.subr.bf16.mxu0 0
    %691 = vmatpush2.bf16.msra.mxu0 0
    %692 = vmatprep.mubr.bf16.mxu0 0
    %693 = vmatmul.mubr.bf16.gmra.mxu0 %v588
    %v694 = vpop.f32.mrf.mxu0
    %v695 = vadd.f32 0.0, %v694
    %v696 = vpop.f32.mrf.mxu0
    %v697 = vpop.f32.mrf.mxu0
    %v698 = vadd.f32 0.0, %v697
    %v699 = vpop.f32.mrf.mxu0
    %700 = vmatprep.mubr.bf16.mxu0 0
    %701 = vmatmul.mubr.bf16.gmra.mxu0 %v589
    %v702 = vpop.f32.mrf.mxu0
    %v703 = vadd.f32 0.0, %v702
    %v704 = vpop.f32.mrf.mxu0
    %v705 = vpop.f32.mrf.mxu0
    %v706 = vadd.f32 0.0, %v705
    %v707 = vpop.f32.mrf.mxu0
    %708 = vmatprep.mubr.bf16.mxu0 0
    %709 = vmatmul.mubr.bf16.gmra.mxu0 %v590
    %v710 = vpop.f32.mrf.mxu0
    %v711 = vadd.f32 0.0, %v710
    %v712 = vpop.f32.mrf.mxu0
    %v713 = vpop.f32.mrf.mxu0
    %v714 = vadd.f32 0.0, %v713
    %v715 = vpop.f32.mrf.mxu0
    %716 = vmatprep.mubr.bf16.mxu0 0
    %717 = vmatmul.mubr.bf16.gmra.mxu0 %v591
    %v718 = vpop.f32.mrf.mxu0
    %v719 = vadd.f32 0.0, %v718
    %v720 = vpop.f32.mrf.mxu0
    %v721 = vpop.f32.mrf.mxu0
    %v722 = vadd.f32 0.0, %v721
    %v723 = vpop.f32.mrf.mxu0
    %724 = vmatprep.mubr.bf16.mxu0 0
    %725 = vmatmul.mubr.bf16.gmra.mxu0 %v592
    %v726 = vpop.f32.mrf.mxu0
    %v727 = vadd.f32 0.0, %v726
    %v728 = vpop.f32.mrf.mxu0
    %v729 = vpop.f32.mrf.mxu0
    %v730 = vadd.f32 0.0, %v729
    %v731 = vpop.f32.mrf.mxu0
    %732 = vmatprep.mubr.bf16.mxu0 0
    %733 = vmatmul.mubr.bf16.gmra.mxu0 %v593
    %v734 = vpop.f32.mrf.mxu0
    %v735 = vadd.f32 0.0, %v734
    %v736 = vpop.f32.mrf.mxu0
    %v737 = vpop.f32.mrf.mxu0
    %v738 = vadd.f32 0.0, %v737
    %v739 = vpop.f32.mrf.mxu0
    %740 = vmatprep.mubr.bf16.mxu0 0
    %741 = vmatmul.mubr.bf16.gmra.mxu0 %v594
    %v742 = vpop.f32.mrf.mxu0
    %v743 = vadd.f32 0.0, %v742
    %v744 = vpop.f32.mrf.mxu0
    %v745 = vpop.f32.mrf.mxu0
    %v746 = vadd.f32 0.0, %v745
    %v747 = vpop.f32.mrf.mxu0
    %748 = vmatprep.mubr.bf16.mxu0 0
    %749 = vmatmul.mubr.bf16.gmra.mxu0 %v595
    %v750 = vpop.f32.mrf.mxu0
    %v751 = vadd.f32 0.0, %v750
    %v752 = vpop.f32.mrf.mxu0
    %v753 = vpop.f32.mrf.mxu0
    %v754 = vadd.f32 0.0, %v753
    %v755 = vpop.f32.mrf.mxu0
    %756 = vdwg.mxu0
    %v757 = vpack.c.bf16 %v698, %v695
    %v758 = vpack.c.bf16 %v706, %v703
    %v759 = vpack.c.bf16 %v714, %v711
    %v760 = vpack.c.bf16 %v722, %v719
    %v761 = vpack.c.bf16 %v730, %v727
    %v762 = vpack.c.bf16 %v738, %v735
    %v763 = vpack.c.bf16 %v746, %v743
    %v764 = vpack.c.bf16 %v754, %v751
    %v765 = vld [vmem:[#allocation10] sm:$0xf]
    %v766 = vld [vmem:[#allocation10 + $0x4] sm:$0xf]
    %v767 = vld [vmem:[#allocation10 + $0x8] sm:$0xf]
    %v768 = vld [vmem:[#allocation10 + $0xc] sm:$0xf]
    %v769 = vld [vmem:[#allocation10 + $0x10] sm:$0xf]
    %v770 = vld [vmem:[#allocation10 + $0x14] sm:$0xf]
    %v771 = vld [vmem:[#allocation10 + $0x18] sm:$0xf]
    %v772 = vld [vmem:[#allocation10 + $0x1c] sm:$0xf]
    %v773 = vld [vmem:[#allocation10 + $0x20] sm:$0xf]
    %v774 = vld [vmem:[#allocation10 + $0x24] sm:$0xf]
    %v775 = vld [vmem:[#allocation10 + $0x28] sm:$0xf]
    %v776 = vld [vmem:[#allocation10 + $0x2c] sm:$0xf]
    %v777 = vld [vmem:[#allocation10 + $0x30] sm:$0xf]
    %v778 = vld [vmem:[#allocation10 + $0x34] sm:$0xf]
    %v779 = vld [vmem:[#allocation10 + $0x38] sm:$0xf]
    %v780 = vld [vmem:[#allocation10 + $0x3c] sm:$0xf]
    %v797 = vunpack.c.l.b16 %v765
    %v798 = vunpack.c.l.b16 %v766
    %v799 = vunpack.c.l.b16 %v767
    %v800 = vunpack.c.l.b16 %v768
    %v801 = vunpack.c.l.b16 %v769
    %v802 = vunpack.c.l.b16 %v770
    %v803 = vunpack.c.l.b16 %v771
    %v804 = vunpack.c.l.b16 %v772
    %v805 = vunpack.c.l.b16 %v773
    %v806 = vunpack.c.l.b16 %v774
    %v807 = vunpack.c.l.b16 %v775
    %v808 = vunpack.c.l.b16 %v776
    %v809 = vunpack.c.l.b16 %v777
    %v810 = vunpack.c.l.b16 %v778
    %v811 = vunpack.c.l.b16 %v779
    %v812 = vunpack.c.l.b16 %v780
    %v813 = vpack.c.b16 %v798, %v797
    %v814 = vpack.c.b16 %v800, %v799
    %v815 = vpack.c.b16 %v802, %v801
    %v816 = vpack.c.b16 %v804, %v803
    %v817 = vpack.c.b16 %v806, %v805
    %v818 = vpack.c.b16 %v808, %v807
    %v819 = vpack.c.b16 %v810, %v809
    %v820 = vpack.c.b16 %v812, %v811
    %829 = vmatprep.subr.bf16.mxu0 0
    %830 = vmatpush1.bf16.msra.mxu0 %v820
    %831 = vmatprep.subr.bf16.mxu0 0
    %832 = vmatpush1.bf16.msra.mxu0 %v819
    %833 = vmatprep.subr.bf16.mxu0 0
    %834 = vmatpush1.bf16.msra.mxu0 %v818
    %835 = vmatprep.subr.bf16.mxu0 0
    %836 = vmatpush1.bf16.msra.mxu0 %v817
    %837 = vmatprep.subr.bf16.mxu0 0
    %838 = vmatpush1.bf16.msra.mxu0 %v816
    %839 = vmatprep.subr.bf16.mxu0 0
    %840 = vmatpush1.bf16.msra.mxu0 %v815
    %841 = vmatprep.subr.bf16.mxu0 0
    %842 = vmatpush1.bf16.msra.mxu0 %v814
    %843 = vmatprep.subr.bf16.mxu0 0
    %844 = vmatpush1.bf16.msra.mxu0 %v813
    %845 = vmatprep.subr.bf16.mxu0 0
    %846 = vmatpush2.bf16.msra.mxu0 0
    %847 = vmatprep.subr.bf16.mxu0 0
    %848 = vmatpush2.bf16.msra.mxu0 0
    %849 = vmatprep.subr.bf16.mxu0 0
    %850 = vmatpush2.bf16.msra.mxu0 0
    %851 = vmatprep.subr.bf16.mxu0 0
    %852 = vmatpush2.bf16.msra.mxu0 0
    %853 = vmatprep.subr.bf16.mxu0 0
    %854 = vmatpush2.bf16.msra.mxu0 0
    %855 = vmatprep.subr.bf16.mxu0 0
    %856 = vmatpush2.bf16.msra.mxu0 0
    %857 = vmatprep.subr.bf16.mxu0 0
    %858 = vmatpush2.bf16.msra.mxu0 0
    %859 = vmatprep.subr.bf16.mxu0 0
    %860 = vmatpush2.bf16.msra.mxu0 0
    %861 = vmatprep.mubr.bf16.mxu0 0
    %862 = vmatmul.mubr.bf16.gmra.mxu0 %v757
    %v863 = vpop.f32.mrf.mxu0
    %v864 = vadd.f32 0.0, %v863
    %v865 = vpop.f32.mrf.mxu0
    %v866 = vpop.f32.mrf.mxu0
    %v867 = vadd.f32 0.0, %v866
    %v868 = vpop.f32.mrf.mxu0
    %869 = vmatprep.mubr.bf16.mxu0 0
    %870 = vmatmul.mubr.bf16.gmra.mxu0 %v758
    %v871 = vpop.f32.mrf.mxu0
    %v872 = vadd.f32 0.0, %v871
    %v873 = vpop.f32.mrf.mxu0
    %v874 = vpop.f32.mrf.mxu0
    %v875 = vadd.f32 0.0, %v874
    %v876 = vpop.f32.mrf.mxu0
    %877 = vmatprep.mubr.bf16.mxu0 0
    %878 = vmatmul.mubr.bf16.gmra.mxu0 %v759
    %v879 = vpop.f32.mrf.mxu0
    %v880 = vadd.f32 0.0, %v879
    %v881 = vpop.f32.mrf.mxu0
    %v882 = vpop.f32.mrf.mxu0
    %v883 = vadd.f32 0.0, %v882
    %v884 = vpop.f32.mrf.mxu0
    %885 = vmatprep.mubr.bf16.mxu0 0
    %886 = vmatmul.mubr.bf16.gmra.mxu0 %v760
    %v887 = vpop.f32.mrf.mxu0
    %v888 = vadd.f32 0.0, %v887
    %v889 = vpop.f32.mrf.mxu0
    %v890 = vpop.f32.mrf.mxu0
    %v891 = vadd.f32 0.0, %v890
    %v892 = vpop.f32.mrf.mxu0
    %893 = vmatprep.mubr.bf16.mxu0 0
    %894 = vmatmul.mubr.bf16.gmra.mxu0 %v761
    %v895 = vpop.f32.mrf.mxu0
    %v896 = vadd.f32 0.0, %v895
    %v897 = vpop.f32.mrf.mxu0
    %v898 = vpop.f32.mrf.mxu0
    %v899 = vadd.f32 0.0, %v898
    %v900 = vpop.f32.mrf.mxu0
    %901 = vmatprep.mubr.bf16.mxu0 0
    %902 = vmatmul.mubr.bf16.gmra.mxu0 %v762
    %v903 = vpop.f32.mrf.mxu0
    %v904 = vadd.f32 0.0, %v903
    %v905 = vpop.f32.mrf.mxu0
    %v906 = vpop.f32.mrf.mxu0
    %v907 = vadd.f32 0.0, %v906
    %v908 = vpop.f32.mrf.mxu0
    %909 = vmatprep.mubr.bf16.mxu0 0
    %910 = vmatmul.mubr.bf16.gmra.mxu0 %v763
    %v911 = vpop.f32.mrf.mxu0
    %v912 = vadd.f32 0.0, %v911
    %v913 = vpop.f32.mrf.mxu0
    %v914 = vpop.f32.mrf.mxu0
    %v915 = vadd.f32 0.0, %v914
    %v916 = vpop.f32.mrf.mxu0
    %917 = vmatprep.mubr.bf16.mxu0 0
    %918 = vmatmul.mubr.bf16.gmra.mxu0 %v764
    %v919 = vpop.f32.mrf.mxu0
    %v920 = vadd.f32 0.0, %v919
    %v921 = vpop.f32.mrf.mxu0
    %v922 = vpop.f32.mrf.mxu0
    %v923 = vadd.f32 0.0, %v922
    %v924 = vpop.f32.mrf.mxu0
    %925 = vdwg.mxu0
    %v926 = vpack.c.bf16 %v867, %v864
    %v927 = vpack.c.bf16 %v875, %v872
    %v928 = vpack.c.bf16 %v883, %v880
    %v929 = vpack.c.bf16 %v891, %v888
    %v930 = vpack.c.bf16 %v899, %v896
    %v931 = vpack.c.bf16 %v907, %v904
    %v932 = vpack.c.bf16 %v915, %v912
    %v933 = vpack.c.bf16 %v923, %v920
    %v934 = vld [vmem:[#allocation13] sm:$0xf]
    %v935 = vld [vmem:[#allocation13 + $0x4] sm:$0xf]
    %v936 = vld [vmem:[#allocation13 + $0x8] sm:$0xf]
    %v937 = vld [vmem:[#allocation13 + $0xc] sm:$0xf]
    %v938 = vld [vmem:[#allocation13 + $0x10] sm:$0xf]
    %v939 = vld [vmem:[#allocation13 + $0x14] sm:$0xf]
    %v940 = vld [vmem:[#allocation13 + $0x18] sm:$0xf]
    %v941 = vld [vmem:[#allocation13 + $0x1c] sm:$0xf]
    %v942 = vld [vmem:[#allocation13 + $0x20] sm:$0xf]
    %v943 = vld [vmem:[#allocation13 + $0x24] sm:$0xf]
    %v944 = vld [vmem:[#allocation13 + $0x28] sm:$0xf]
    %v945 = vld [vmem:[#allocation13 + $0x2c] sm:$0xf]
    %v946 = vld [vmem:[#allocation13 + $0x30] sm:$0xf]
    %v947 = vld [vmem:[#allocation13 + $0x34] sm:$0xf]
    %v948 = vld [vmem:[#allocation13 + $0x38] sm:$0xf]
    %v949 = vld [vmem:[#allocation13 + $0x3c] sm:$0xf]
    %v966 = vunpack.c.l.b16 %v934
    %v967 = vunpack.c.l.b16 %v935
    %v968 = vunpack.c.l.b16 %v936
    %v969 = vunpack.c.l.b16 %v937
    %v970 = vunpack.c.l.b16 %v938
    %v971 = vunpack.c.l.b16 %v939
    %v972 = vunpack.c.l.b16 %v940
    %v973 = vunpack.c.l.b16 %v941
    %v974 = vunpack.c.l.b16 %v942
    %v975 = vunpack.c.l.b16 %v943
    %v976 = vunpack.c.l.b16 %v944
    %v977 = vunpack.c.l.b16 %v945
    %v978 = vunpack.c.l.b16 %v946
    %v979 = vunpack.c.l.b16 %v947
    %v980 = vunpack.c.l.b16 %v948
    %v981 = vunpack.c.l.b16 %v949
    %v982 = vpack.c.b16 %v967, %v966
    %v983 = vpack.c.b16 %v969, %v968
    %v984 = vpack.c.b16 %v971, %v970
    %v985 = vpack.c.b16 %v973, %v972
    %v986 = vpack.c.b16 %v975, %v974
    %v987 = vpack.c.b16 %v977, %v976
    %v988 = vpack.c.b16 %v979, %v978
    %v989 = vpack.c.b16 %v981, %v980
    %998 = vmatprep.subr.bf16.mxu0 0
    %999 = vmatpush1.bf16.msra.mxu0 %v989
    %1000 = vmatprep.subr.bf16.mxu0 0
    %1001 = vmatpush1.bf16.msra.mxu0 %v988
    %1002 = vmatprep.subr.bf16.mxu0 0
    %1003 = vmatpush1.bf16.msra.mxu0 %v987
    %1004 = vmatprep.subr.bf16.mxu0 0
    %1005 = vmatpush1.bf16.msra.mxu0 %v986
    %1006 = vmatprep.subr.bf16.mxu0 0
    %1007 = vmatpush1.bf16.msra.mxu0 %v985
    %1008 = vmatprep.subr.bf16.mxu0 0
    %1009 = vmatpush1.bf16.msra.mxu0 %v984
    %1010 = vmatprep.subr.bf16.mxu0 0
    %1011 = vmatpush1.bf16.msra.mxu0 %v983
    %1012 = vmatprep.subr.bf16.mxu0 0
    %1013 = vmatpush1.bf16.msra.mxu0 %v982
    %1014 = vmatprep.subr.bf16.mxu0 0
    %1015 = vmatpush2.bf16.msra.mxu0 0
    %1016 = vmatprep.subr.bf16.mxu0 0
    %1017 = vmatpush2.bf16.msra.mxu0 0
    %1018 = vmatprep.subr.bf16.mxu0 0
    %1019 = vmatpush2.bf16.msra.mxu0 0
    %1020 = vmatprep.subr.bf16.mxu0 0
    %1021 = vmatpush2.bf16.msra.mxu0 0
    %1022 = vmatprep.subr.bf16.mxu0 0
    %1023 = vmatpush2.bf16.msra.mxu0 0
    %1024 = vmatprep.subr.bf16.mxu0 0
    %1025 = vmatpush2.bf16.msra.mxu0 0
    %1026 = vmatprep.subr.bf16.mxu0 0
    %1027 = vmatpush2.bf16.msra.mxu0 0
    %1028 = vmatprep.subr.bf16.mxu0 0
    %1029 = vmatpush2.bf16.msra.mxu0 0
    %1030 = vmatprep.mubr.bf16.mxu0 0
    %1031 = vmatmul.mubr.bf16.gmra.mxu0 %v926
    %v1032 = vpop.f32.mrf.mxu0
    %v1033 = vadd.f32 0.0, %v1032
    %v1034 = vpop.f32.mrf.mxu0
    %v1035 = vpop.f32.mrf.mxu0
    %v1036 = vadd.f32 0.0, %v1035
    %v1037 = vpop.f32.mrf.mxu0
    %1038 = vmatprep.mubr.bf16.mxu0 0
    %1039 = vmatmul.mubr.bf16.gmra.mxu0 %v927
    %v1040 = vpop.f32.mrf.mxu0
    %v1041 = vadd.f32 0.0, %v1040
    %v1042 = vpop.f32.mrf.mxu0
    %v1043 = vpop.f32.mrf.mxu0
    %v1044 = vadd.f32 0.0, %v1043
    %v1045 = vpop.f32.mrf.mxu0
    %1046 = vmatprep.mubr.bf16.mxu0 0
    %1047 = vmatmul.mubr.bf16.gmra.mxu0 %v928
    %v1048 = vpop.f32.mrf.mxu0
    %v1049 = vadd.f32 0.0, %v1048
    %v1050 = vpop.f32.mrf.mxu0
    %v1051 = vpop.f32.mrf.mxu0
    %v1052 = vadd.f32 0.0, %v1051
    %v1053 = vpop.f32.mrf.mxu0
    %1054 = vmatprep.mubr.bf16.mxu0 0
    %1055 = vmatmul.mubr.bf16.gmra.mxu0 %v929
    %v1056 = vpop.f32.mrf.mxu0
    %v1057 = vadd.f32 0.0, %v1056
    %v1058 = vpop.f32.mrf.mxu0
    %v1059 = vpop.f32.mrf.mxu0
    %v1060 = vadd.f32 0.0, %v1059
    %v1061 = vpop.f32.mrf.mxu0
    %1062 = vmatprep.mubr.bf16.mxu0 0
    %1063 = vmatmul.mubr.bf16.gmra.mxu0 %v930
    %v1064 = vpop.f32.mrf.mxu0
    %v1065 = vadd.f32 0.0, %v1064
    %v1066 = vpop.f32.mrf.mxu0
    %v1067 = vpop.f32.mrf.mxu0
    %v1068 = vadd.f32 0.0, %v1067
    %v1069 = vpop.f32.mrf.mxu0
    %1070 = vmatprep.mubr.bf16.mxu0 0
    %1071 = vmatmul.mubr.bf16.gmra.mxu0 %v931
    %v1072 = vpop.f32.mrf.mxu0
    %v1073 = vadd.f32 0.0, %v1072
    %v1074 = vpop.f32.mrf.mxu0
    %v1075 = vpop.f32.mrf.mxu0
    %v1076 = vadd.f32 0.0, %v1075
    %v1077 = vpop.f32.mrf.mxu0
    %1078 = vmatprep.mubr.bf16.mxu0 0
    %1079 = vmatmul.mubr.bf16.gmra.mxu0 %v932
    %v1080 = vpop.f32.mrf.mxu0
    %v1081 = vadd.f32 0.0, %v1080
    %v1082 = vpop.f32.mrf.mxu0
    %v1083 = vpop.f32.mrf.mxu0
    %v1084 = vadd.f32 0.0, %v1083
    %v1085 = vpop.f32.mrf.mxu0
    %1086 = vmatprep.mubr.bf16.mxu0 0
    %1087 = vmatmul.mubr.bf16.gmra.mxu0 %v933
    %v1088 = vpop.f32.mrf.mxu0
    %v1089 = vadd.f32 0.0, %v1088
    %v1090 = vpop.f32.mrf.mxu0
    %v1091 = vpop.f32.mrf.mxu0
    %v1092 = vadd.f32 0.0, %v1091
    %v1093 = vpop.f32.mrf.mxu0
    %1094 = vdwg.mxu0
    %v1095 = vpack.c.bf16 %v1036, %v1033
    %v1096 = vpack.c.bf16 %v1044, %v1041
    %v1097 = vpack.c.bf16 %v1052, %v1049
    %v1098 = vpack.c.bf16 %v1060, %v1057
    %v1099 = vpack.c.bf16 %v1068, %v1065
    %v1100 = vpack.c.bf16 %v1076, %v1073
    %v1101 = vpack.c.bf16 %v1084, %v1081
    %v1102 = vpack.c.bf16 %v1092, %v1089
    %v1103 = vld [vmem:[#allocation14] sm:$0xff]
    %v1104 = vld [vmem:[#allocation14 + $0x8] sm:$0xff]
    %v1105 = vld [vmem:[#allocation14 + $0x10] sm:$0xff]
    %v1106 = vld [vmem:[#allocation14 + $0x18] sm:$0xff]
    %v1107 = vld [vmem:[#allocation14 + $0x20] sm:$0xff]
    %v1108 = vld [vmem:[#allocation14 + $0x28] sm:$0xff]
    %v1109 = vld [vmem:[#allocation14 + $0x30] sm:$0xff]
    %v1110 = vld [vmem:[#allocation14 + $0x38] sm:$0xff]
    %v1111 = vld [vmem:[#allocation14 + $0x40] sm:$0xff]
    %v1112 = vld [vmem:[#allocation14 + $0x48] sm:$0xff]
    %v1113 = vld [vmem:[#allocation14 + $0x50] sm:$0xff]
    %v1114 = vld [vmem:[#allocation14 + $0x58] sm:$0xff]
    %v1115 = vld [vmem:[#allocation14 + $0x60] sm:$0xff]
    %v1116 = vld [vmem:[#allocation14 + $0x68] sm:$0xff]
    %v1117 = vld [vmem:[#allocation14 + $0x70] sm:$0xff]
    %v1118 = vld [vmem:[#allocation14 + $0x78] sm:$0xff]
    %v1135 = vunpack.c.l.b16 %v1103
    %v1136 = vunpack.c.h.b16 %v1103
    %v1137 = vunpack.c.l.b16 %v1104
    %v1138 = vunpack.c.h.b16 %v1104
    %v1139 = vunpack.c.l.b16 %v1105
    %v1140 = vunpack.c.h.b16 %v1105
    %v1141 = vunpack.c.l.b16 %v1106
    %v1142 = vunpack.c.h.b16 %v1106
    %v1143 = vunpack.c.l.b16 %v1107
    %v1144 = vunpack.c.h.b16 %v1107
    %v1145 = vunpack.c.l.b16 %v1108
    %v1146 = vunpack.c.h.b16 %v1108
    %v1147 = vunpack.c.l.b16 %v1109
    %v1148 = vunpack.c.h.b16 %v1109
    %v1149 = vunpack.c.l.b16 %v1110
    %v1150 = vunpack.c.h.b16 %v1110
    %v1151 = vunpack.c.l.b16 %v1111
    %v1152 = vunpack.c.h.b16 %v1111
    %v1153 = vunpack.c.l.b16 %v1112
    %v1154 = vunpack.c.h.b16 %v1112
    %v1155 = vunpack.c.l.b16 %v1113
    %v1156 = vunpack.c.h.b16 %v1113
    %v1157 = vunpack.c.l.b16 %v1114
    %v1158 = vunpack.c.h.b16 %v1114
    %v1159 = vunpack.c.l.b16 %v1115
    %v1160 = vunpack.c.h.b16 %v1115
    %v1161 = vunpack.c.l.b16 %v1116
    %v1162 = vunpack.c.h.b16 %v1116
    %v1163 = vunpack.c.l.b16 %v1117
    %v1164 = vunpack.c.h.b16 %v1117
    %v1165 = vunpack.c.l.b16 %v1118
    %v1166 = vunpack.c.h.b16 %v1118
    %v1167 = vpack.c.b16 %v1137, %v1135
    %v1168 = vpack.c.b16 %v1138, %v1136
    %v1169 = vpack.c.b16 %v1141, %v1139
    %v1170 = vpack.c.b16 %v1142, %v1140
    %v1171 = vpack.c.b16 %v1145, %v1143
    %v1172 = vpack.c.b16 %v1146, %v1144
    %v1173 = vpack.c.b16 %v1149, %v1147
    %v1174 = vpack.c.b16 %v1150, %v1148
    %v1175 = vpack.c.b16 %v1153, %v1151
    %v1176 = vpack.c.b16 %v1154, %v1152
    %v1177 = vpack.c.b16 %v1157, %v1155
    %v1178 = vpack.c.b16 %v1158, %v1156
    %v1179 = vpack.c.b16 %v1161, %v1159
    %v1180 = vpack.c.b16 %v1162, %v1160
    %v1181 = vpack.c.b16 %v1165, %v1163
    %v1182 = vpack.c.b16 %v1166, %v1164
    %1199 = vmatprep.subr.bf16.mxu0 %v1182
    %1200 = vmatpush1.bf16.msra.mxu0 %v1181
    %1201 = vmatprep.subr.bf16.mxu0 %v1180
    %1202 = vmatpush1.bf16.msra.mxu0 %v1179
    %1203 = vmatprep.subr.bf16.mxu0 %v1178
    %1204 = vmatpush1.bf16.msra.mxu0 %v1177
    %1205 = vmatprep.subr.bf16.mxu0 %v1176
    %1206 = vmatpush1.bf16.msra.mxu0 %v1175
    %1207 = vmatprep.subr.bf16.mxu0 %v1174
    %1208 = vmatpush1.bf16.msra.mxu0 %v1173
    %1209 = vmatprep.subr.bf16.mxu0 %v1172
    %1210 = vmatpush1.bf16.msra.mxu0 %v1171
    %1211 = vmatprep.subr.bf16.mxu0 %v1170
    %1212 = vmatpush1.bf16.msra.mxu0 %v1169
    %1213 = vmatprep.subr.bf16.mxu0 %v1168
    %1214 = vmatpush1.bf16.msra.mxu0 %v1167
    %1215 = vmatprep.subr.bf16.mxu0 0
    %1216 = vmatpush2.bf16.msra.mxu0 0
    %1217 = vmatprep.subr.bf16.mxu0 0
    %1218 = vmatpush2.bf16.msra.mxu0 0
    %1219 = vmatprep.subr.bf16.mxu0 0
    %1220 = vmatpush2.bf16.msra.mxu0 0
    %1221 = vmatprep.subr.bf16.mxu0 0
    %1222 = vmatpush2.bf16.msra.mxu0 0
    %1223 = vmatprep.subr.bf16.mxu0 0
    %1224 = vmatpush2.bf16.msra.mxu0 0
    %1225 = vmatprep.subr.bf16.mxu0 0
    %1226 = vmatpush2.bf16.msra.mxu0 0
    %1227 = vmatprep.subr.bf16.mxu0 0
    %1228 = vmatpush2.bf16.msra.mxu0 0
    %1229 = vmatprep.subr.bf16.mxu0 0
    %1230 = vmatpush2.bf16.msra.mxu0 0
    %1231 = vmatprep.mubr.bf16.mxu0 0
    %1232 = vmatmul.mubr.bf16.gmra.mxu0 %v1095
    %v1233 = vpop.f32.mrf.mxu0
    %v1234 = vadd.f32 0.0, %v1233
    %v1235 = vpop.f32.mrf.mxu0
    %v1236 = vadd.f32 0.0, %v1235
    %v1237 = vpop.f32.mrf.mxu0
    %v1238 = vadd.f32 0.0, %v1237
    %v1239 = vpop.f32.mrf.mxu0
    %v1240 = vadd.f32 0.0, %v1239
    %1241 = vmatprep.mubr.bf16.mxu0 0
    %1242 = vmatmul.mubr.bf16.gmra.mxu0 %v1096
    %v1243 = vpop.f32.mrf.mxu0
    %v1244 = vadd.f32 0.0, %v1243
    %v1245 = vpop.f32.mrf.mxu0
    %v1246 = vadd.f32 0.0, %v1245
    %v1247 = vpop.f32.mrf.mxu0
    %v1248 = vadd.f32 0.0, %v1247
    %v1249 = vpop.f32.mrf.mxu0
    %v1250 = vadd.f32 0.0, %v1249
    %1251 = vmatprep.mubr.bf16.mxu0 0
    %1252 = vmatmul.mubr.bf16.gmra.mxu0 %v1097
    %v1253 = vpop.f32.mrf.mxu0
    %v1254 = vadd.f32 0.0, %v1253
    %v1255 = vpop.f32.mrf.mxu0
    %v1256 = vadd.f32 0.0, %v1255
    %v1257 = vpop.f32.mrf.mxu0
    %v1258 = vadd.f32 0.0, %v1257
    %v1259 = vpop.f32.mrf.mxu0
    %v1260 = vadd.f32 0.0, %v1259
    %1261 = vmatprep.mubr.bf16.mxu0 0
    %1262 = vmatmul.mubr.bf16.gmra.mxu0 %v1098
    %v1263 = vpop.f32.mrf.mxu0
    %v1264 = vadd.f32 0.0, %v1263
    %v1265 = vpop.f32.mrf.mxu0
    %v1266 = vadd.f32 0.0, %v1265
    %v1267 = vpop.f32.mrf.mxu0
    %v1268 = vadd.f32 0.0, %v1267
    %v1269 = vpop.f32.mrf.mxu0
    %v1270 = vadd.f32 0.0, %v1269
    %1271 = vmatprep.mubr.bf16.mxu0 0
    %1272 = vmatmul.mubr.bf16.gmra.mxu0 %v1099
    %v1273 = vpop.f32.mrf.mxu0
    %v1274 = vadd.f32 0.0, %v1273
    %v1275 = vpop.f32.mrf.mxu0
    %v1276 = vadd.f32 0.0, %v1275
    %v1277 = vpop.f32.mrf.mxu0
    %v1278 = vadd.f32 0.0, %v1277
    %v1279 = vpop.f32.mrf.mxu0
    %v1280 = vadd.f32 0.0, %v1279
    %1281 = vmatprep.mubr.bf16.mxu0 0
    %1282 = vmatmul.mubr.bf16.gmra.mxu0 %v1100
    %v1283 = vpop.f32.mrf.mxu0
    %v1284 = vadd.f32 0.0, %v1283
    %v1285 = vpop.f32.mrf.mxu0
    %v1286 = vadd.f32 0.0, %v1285
    %v1287 = vpop.f32.mrf.mxu0
    %v1288 = vadd.f32 0.0, %v1287
    %v1289 = vpop.f32.mrf.mxu0
    %v1290 = vadd.f32 0.0, %v1289
    %1291 = vmatprep.mubr.bf16.mxu0 0
    %1292 = vmatmul.mubr.bf16.gmra.mxu0 %v1101
    %v1293 = vpop.f32.mrf.mxu0
    %v1294 = vadd.f32 0.0, %v1293
    %v1295 = vpop.f32.mrf.mxu0
    %v1296 = vadd.f32 0.0, %v1295
    %v1297 = vpop.f32.mrf.mxu0
    %v1298 = vadd.f32 0.0, %v1297
    %v1299 = vpop.f32.mrf.mxu0
    %v1300 = vadd.f32 0.0, %v1299
    %1301 = vmatprep.mubr.bf16.mxu0 0
    %1302 = vmatmul.mubr.bf16.gmra.mxu0 %v1102
    %v1303 = vpop.f32.mrf.mxu0
    %v1304 = vadd.f32 0.0, %v1303
    %v1305 = vpop.f32.mrf.mxu0
    %v1306 = vadd.f32 0.0, %v1305
    %v1307 = vpop.f32.mrf.mxu0
    %v1308 = vadd.f32 0.0, %v1307
    %v1309 = vpop.f32.mrf.mxu0
    %v1310 = vadd.f32 0.0, %v1309
    %1311 = vdwg.mxu0
    %v1312 = vpack.c.bf16 %v1238, %v1234
    %v1313 = vpack.c.bf16 %v1240, %v1236
    %v1314 = vpack.c.bf16 %v1248, %v1244
    %v1315 = vpack.c.bf16 %v1250, %v1246
    %v1316 = vpack.c.bf16 %v1258, %v1254
    %v1317 = vpack.c.bf16 %v1260, %v1256
    %v1318 = vpack.c.bf16 %v1268, %v1264
    %v1319 = vpack.c.bf16 %v1270, %v1266
    %v1320 = vpack.c.bf16 %v1278, %v1274
    %v1321 = vpack.c.bf16 %v1280, %v1276
    %v1322 = vpack.c.bf16 %v1288, %v1284
    %v1323 = vpack.c.bf16 %v1290, %v1286
    %v1324 = vpack.c.bf16 %v1298, %v1294
    %v1325 = vpack.c.bf16 %v1300, %v1296
    %v1326 = vpack.c.bf16 %v1308, %v1304
    %v1327 = vpack.c.bf16 %v1310, %v1306
    %1328 = vmatprep.subr.bf16.mxu0 0
    %1329 = vmatpush1.bf16.msra.mxu0 %v297
    %1330 = vmatprep.subr.bf16.mxu0 0
    %1331 = vmatpush1.bf16.msra.mxu0 %v296
    %1332 = vmatprep.subr.bf16.mxu0 0
    %1333 = vmatpush1.bf16.msra.mxu0 %v295
    %1334 = vmatprep.subr.bf16.mxu0 0
    %1335 = vmatpush1.bf16.msra.mxu0 %v294
    %1336 = vmatprep.subr.bf16.mxu0 0
    %1337 = vmatpush1.bf16.msra.mxu0 %v293
    %1338 = vmatprep.subr.bf16.mxu0 0
    %1339 = vmatpush1.bf16.msra.mxu0 %v292
    %1340 = vmatprep.subr.bf16.mxu0 0
    %1341 = vmatpush1.bf16.msra.mxu0 %v291
    %1342 = vmatprep.subr.bf16.mxu0 0
    %1343 = vmatpush1.bf16.msra.mxu0 %v290
    %1344 = vmatprep.subr.bf16.mxu0 0
    %1345 = vmatpush2.bf16.msra.mxu0 %v305
    %1346 = vmatprep.subr.bf16.mxu0 0
    %1347 = vmatpush2.bf16.msra.mxu0 %v304
    %1348 = vmatprep.subr.bf16.mxu0 0
    %1349 = vmatpush2.bf16.msra.mxu0 %v303
    %1350 = vmatprep.subr.bf16.mxu0 0
    %1351 = vmatpush2.bf16.msra.mxu0 %v302
    %1352 = vmatprep.subr.bf16.mxu0 0
    %1353 = vmatpush2.bf16.msra.mxu0 %v301
    %1354 = vmatprep.subr.bf16.mxu0 0
    %1355 = vmatpush2.bf16.msra.mxu0 %v300
    %1356 = vmatprep.subr.bf16.mxu0 0
    %1357 = vmatpush2.bf16.msra.mxu0 %v299
    %1358 = vmatprep.subr.bf16.mxu0 0
    %1359 = vmatpush2.bf16.msra.mxu0 %v298
    %1360 = vmatprep.mubr.bf16.mxu0 %v1313
    %1361 = vmatmul.mubr.bf16.gmra.mxu0 %v1312
    %v1362 = vpop.f32.mrf.mxu0
    %v1363 = vadd.f32 0.0, %v1362
    %v1364 = vpop.f32.mrf.mxu0
    %v1365 = vpop.f32.mrf.mxu0
    %v1366 = vadd.f32 0.0, %v1365
    %v1367 = vpop.f32.mrf.mxu0
    %1368 = vmatprep.mubr.bf16.mxu0 %v1315
    %1369 = vmatmul.mubr.bf16.gmra.mxu0 %v1314
    %v1370 = vpop.f32.mrf.mxu0
    %v1371 = vadd.f32 0.0, %v1370
    %v1372 = vpop.f32.mrf.mxu0
    %v1373 = vpop.f32.mrf.mxu0
    %v1374 = vadd.f32 0.0, %v1373
    %v1375 = vpop.f32.mrf.mxu0
    %1376 = vmatprep.mubr.bf16.mxu0 %v1317
    %1377 = vmatmul.mubr.bf16.gmra.mxu0 %v1316
    %v1378 = vpop.f32.mrf.mxu0
    %v1379 = vadd.f32 0.0, %v1378
    %v1380 = vpop.f32.mrf.mxu0
    %v1381 = vpop.f32.mrf.mxu0
    %v1382 = vadd.f32 0.0, %v1381
    %v1383 = vpop.f32.mrf.mxu0
    %1384 = vmatprep.mubr.bf16.mxu0 %v1319
    %1385 = vmatmul.mubr.bf16.gmra.mxu0 %v1318
    %v1386 = vpop.f32.mrf.mxu0
    %v1387 = vadd.f32 0.0, %v1386
    %v1388 = vpop.f32.mrf.mxu0
    %v1389 = vpop.f32.mrf.mxu0
    %v1390 = vadd.f32 0.0, %v1389
    %v1391 = vpop.f32.mrf.mxu0
    %1392 = vmatprep.mubr.bf16.mxu0 %v1321
    %1393 = vmatmul.mubr.bf16.gmra.mxu0 %v1320
    %v1394 = vpop.f32.mrf.mxu0
    %v1395 = vadd.f32 0.0, %v1394
    %v1396 = vpop.f32.mrf.mxu0
    %v1397 = vpop.f32.mrf.mxu0
    %v1398 = vadd.f32 0.0, %v1397
    %v1399 = vpop.f32.mrf.mxu0
    %1400 = vmatprep.mubr.bf16.mxu0 %v1323
    %1401 = vmatmul.mubr.bf16.gmra.mxu0 %v1322
    %v1402 = vpop.f32.mrf.mxu0
    %v1403 = vadd.f32 0.0, %v1402
    %v1404 = vpop.f32.mrf.mxu0
    %v1405 = vpop.f32.mrf.mxu0
    %v1406 = vadd.f32 0.0, %v1405
    %v1407 = vpop.f32.mrf.mxu0
    %1408 = vmatprep.mubr.bf16.mxu0 %v1325
    %1409 = vmatmul.mubr.bf16.gmra.mxu0 %v1324
    %v1410 = vpop.f32.mrf.mxu0
    %v1411 = vadd.f32 0.0, %v1410
    %v1412 = vpop.f32.mrf.mxu0
    %v1413 = vpop.f32.mrf.mxu0
    %v1414 = vadd.f32 0.0, %v1413
    %v1415 = vpop.f32.mrf.mxu0
    %1416 = vmatprep.mubr.bf16.mxu0 %v1327
    %1417 = vmatmul.mubr.bf16.gmra.mxu0 %v1326
    %v1418 = vpop.f32.mrf.mxu0
    %v1419 = vadd.f32 0.0, %v1418
    %v1420 = vpop.f32.mrf.mxu0
    %v1421 = vpop.f32.mrf.mxu0
    %v1422 = vadd.f32 0.0, %v1421
    %v1423 = vpop.f32.mrf.mxu0
    %1424 = vdwg.mxu0
    %v1425 = vpack.c.bf16 %v1366, %v1363
    %v1426 = vpack.c.bf16 %v1374, %v1371
    %v1427 = vpack.c.bf16 %v1382, %v1379
    %v1428 = vpack.c.bf16 %v1390, %v1387
    %v1429 = vpack.c.bf16 %v1398, %v1395
    %v1430 = vpack.c.bf16 %v1406, %v1403
    %v1431 = vpack.c.bf16 %v1414, %v1411
    %v1432 = vpack.c.bf16 %v1422, %v1419
    %1433 = vmatprep.subr.bf16.mxu0 0
    %1434 = vmatpush1.bf16.msra.mxu0 %v482
    %1435 = vmatprep.subr.bf16.mxu0 0
    %1436 = vmatpush1.bf16.msra.mxu0 %v481
    %1437 = vmatprep.subr.bf16.mxu0 0
    %1438 = vmatpush1.bf16.msra.mxu0 %v480
    %1439 = vmatprep.subr.bf16.mxu0 0
    %1440 = vmatpush1.bf16.msra.mxu0 %v479
    %1441 = vmatprep.subr.bf16.mxu0 0
    %1442 = vmatpush1.bf16.msra.mxu0 %v478
    %1443 = vmatprep.subr.bf16.mxu0 0
    %1444 = vmatpush1.bf16.msra.mxu0 %v477
    %1445 = vmatprep.subr.bf16.mxu0 0
    %1446 = vmatpush1.bf16.msra.mxu0 %v476
    %1447 = vmatprep.subr.bf16.mxu0 0
    %1448 = vmatpush1.bf16.msra.mxu0 %v475
    %1449 = vmatprep.subr.bf16.mxu0 0
    %1450 = vmatpush2.bf16.msra.mxu0 0
    %1451 = vmatprep.subr.bf16.mxu0 0
    %1452 = vmatpush2.bf16.msra.mxu0 0
    %1453 = vmatprep.subr.bf16.mxu0 0
    %1454 = vmatpush2.bf16.msra.mxu0 0
    %1455 = vmatprep.subr.bf16.mxu0 0
    %1456 = vmatpush2.bf16.msra.mxu0 0
    %1457 = vmatprep.subr.bf16.mxu0 0
    %1458 = vmatpush2.bf16.msra.mxu0 0
    %1459 = vmatprep.subr.bf16.mxu0 0
    %1460 = vmatpush2.bf16.msra.mxu0 0
    %1461 = vmatprep.subr.bf16.mxu0 0
    %1462 = vmatpush2.bf16.msra.mxu0 0
    %1463 = vmatprep.subr.bf16.mxu0 0
    %1464 = vmatpush2.bf16.msra.mxu0 0
    %1465 = vmatprep.mubr.bf16.mxu0 0
    %1466 = vmatmul.mubr.bf16.gmra.mxu0 %v1425
    %v1467 = vpop.f32.mrf.mxu0
    %v1468 = vadd.f32 0.0, %v1467
    %v1469 = vpop.f32.mrf.mxu0
    %v1470 = vpop.f32.mrf.mxu0
    %v1471 = vadd.f32 0.0, %v1470
    %v1472 = vpop.f32.mrf.mxu0
    %1473 = vmatprep.mubr.bf16.mxu0 0
    %1474 = vmatmul.mubr.bf16.gmra.mxu0 %v1426
    %v1475 = vpop.f32.mrf.mxu0
    %v1476 = vadd.f32 0.0, %v1475
    %v1477 = vpop.f32.mrf.mxu0
    %v1478 = vpop.f32.mrf.mxu0
    %v1479 = vadd.f32 0.0, %v1478
    %v1480 = vpop.f32.mrf.mxu0
    %1481 = vmatprep.mubr.bf16.mxu0 0
    %1482 = vmatmul.mubr.bf16.gmra.mxu0 %v1427
    %v1483 = vpop.f32.mrf.mxu0
    %v1484 = vadd.f32 0.0, %v1483
    %v1485 = vpop.f32.mrf.mxu0
    %v1486 = vpop.f32.mrf.mxu0
    %v1487 = vadd.f32 0.0, %v1486
    %v1488 = vpop.f32.mrf.mxu0
    %1489 = vmatprep.mubr.bf16.mxu0 0
    %1490 = vmatmul.mubr.bf16.gmra.mxu0 %v1428
    %v1491 = vpop.f32.mrf.mxu0
    %v1492 = vadd.f32 0.0, %v1491
    %v1493 = vpop.f32.mrf.mxu0
    %v1494 = vpop.f32.mrf.mxu0
    %v1495 = vadd.f32 0.0, %v1494
    %v1496 = vpop.f32.mrf.mxu0
    %1497 = vmatprep.mubr.bf16.mxu0 0
    %1498 = vmatmul.mubr.bf16.gmra.mxu0 %v1429
    %v1499 = vpop.f32.mrf.mxu0
    %v1500 = vadd.f32 0.0, %v1499
    %v1501 = vpop.f32.mrf.mxu0
    %v1502 = vpop.f32.mrf.mxu0
    %v1503 = vadd.f32 0.0, %v1502
    %v1504 = vpop.f32.mrf.mxu0
    %1505 = vmatprep.mubr.bf16.mxu0 0
    %1506 = vmatmul.mubr.bf16.gmra.mxu0 %v1430
    %v1507 = vpop.f32.mrf.mxu0
    %v1508 = vadd.f32 0.0, %v1507
    %v1509 = vpop.f32.mrf.mxu0
    %v1510 = vpop.f32.mrf.mxu0
    %v1511 = vadd.f32 0.0, %v1510
    %v1512 = vpop.f32.mrf.mxu0
    %1513 = vmatprep.mubr.bf16.mxu0 0
    %1514 = vmatmul.mubr.bf16.gmra.mxu0 %v1431
    %v1515 = vpop.f32.mrf.mxu0
    %v1516 = vadd.f32 0.0, %v1515
    %v1517 = vpop.f32.mrf.mxu0
    %v1518 = vpop.f32.mrf.mxu0
    %v1519 = vadd.f32 0.0, %v1518
    %v1520 = vpop.f32.mrf.mxu0
    %1521 = vmatprep.mubr.bf16.mxu0 0
    %1522 = vmatmul.mubr.bf16.gmra.mxu0 %v1432
    %v1523 = vpop.f32.mrf.mxu0
    %v1524 = vadd.f32 0.0, %v1523
    %v1525 = vpop.f32.mrf.mxu0
    %v1526 = vpop.f32.mrf.mxu0
    %v1527 = vadd.f32 0.0, %v1526
    %v1528 = vpop.f32.mrf.mxu0
    %1529 = vdwg.mxu0
    %v1530 = vpack.c.bf16 %v1471, %v1468
    %v1531 = vpack.c.bf16 %v1479, %v1476
    %v1532 = vpack.c.bf16 %v1487, %v1484
    %v1533 = vpack.c.bf16 %v1495, %v1492
    %v1534 = vpack.c.bf16 %v1503, %v1500
    %v1535 = vpack.c.bf16 %v1511, %v1508
    %v1536 = vpack.c.bf16 %v1519, %v1516
    %v1537 = vpack.c.bf16 %v1527, %v1524
    %1538 = vmatprep.subr.bf16.mxu0 0
    %1539 = vmatpush1.bf16.msra.mxu0 %v651
    %1540 = vmatprep.subr.bf16.mxu0 0
    %1541 = vmatpush1.bf16.msra.mxu0 %v650
    %1542 = vmatprep.subr.bf16.mxu0 0
    %1543 = vmatpush1.bf16.msra.mxu0 %v649
    %1544 = vmatprep.subr.bf16.mxu0 0
    %1545 = vmatpush1.bf16.msra.mxu0 %v648
    %1546 = vmatprep.subr.bf16.mxu0 0
    %1547 = vmatpush1.bf16.msra.mxu0 %v647
    %1548 = vmatprep.subr.bf16.mxu0 0
    %1549 = vmatpush1.bf16.msra.mxu0 %v646
    %1550 = vmatprep.subr.bf16.mxu0 0
    %1551 = vmatpush1.bf16.msra.mxu0 %v645
    %1552 = vmatprep.subr.bf16.mxu0 0
    %1553 = vmatpush1.bf16.msra.mxu0 %v644
    %1554 = vmatprep.subr.bf16.mxu0 0
    %1555 = vmatpush2.bf16.msra.mxu0 0
    %1556 = vmatprep.subr.bf16.mxu0 0
    %1557 = vmatpush2.bf16.msra.mxu0 0
    %1558 = vmatprep.subr.bf16.mxu0 0
    %1559 = vmatpush2.bf16.msra.mxu0 0
    %1560 = vmatprep.subr.bf16.mxu0 0
    %1561 = vmatpush2.bf16.msra.mxu0 0
    %1562 = vmatprep.subr.bf16.mxu0 0
    %1563 = vmatpush2.bf16.msra.mxu0 0
    %1564 = vmatprep.subr.bf16.mxu0 0
    %1565 = vmatpush2.bf16.msra.mxu0 0
    %1566 = vmatprep.subr.bf16.mxu0 0
    %1567 = vmatpush2.bf16.msra.mxu0 0
    %1568 = vmatprep.subr.bf16.mxu0 0
    %1569 = vmatpush2.bf16.msra.mxu0 0
    %1570 = vmatprep.mubr.bf16.mxu0 0
    %1571 = vmatmul.mubr.bf16.gmra.mxu0 %v1530
    %v1572 = vpop.f32.mrf.mxu0
    %v1573 = vadd.f32 0.0, %v1572
    %v1574 = vpop.f32.mrf.mxu0
    %v1575 = vpop.f32.mrf.mxu0
    %v1576 = vadd.f32 0.0, %v1575
    %v1577 = vpop.f32.mrf.mxu0
    %1578 = vmatprep.mubr.bf16.mxu0 0
    %1579 = vmatmul.mubr.bf16.gmra.mxu0 %v1531
    %v1580 = vpop.f32.mrf.mxu0
    %v1581 = vadd.f32 0.0, %v1580
    %v1582 = vpop.f32.mrf.mxu0
    %v1583 = vpop.f32.mrf.mxu0
    %v1584 = vadd.f32 0.0, %v1583
    %v1585 = vpop.f32.mrf.mxu0
    %1586 = vmatprep.mubr.bf16.mxu0 0
    %1587 = vmatmul.mubr.bf16.gmra.mxu0 %v1532
    %v1588 = vpop.f32.mrf.mxu0
    %v1589 = vadd.f32 0.0, %v1588
    %v1590 = vpop.f32.mrf.mxu0
    %v1591 = vpop.f32.mrf.mxu0
    %v1592 = vadd.f32 0.0, %v1591
    %v1593 = vpop.f32.mrf.mxu0
    %1594 = vmatprep.mubr.bf16.mxu0 0
    %1595 = vmatmul.mubr.bf16.gmra.mxu0 %v1533
    %v1596 = vpop.f32.mrf.mxu0
    %v1597 = vadd.f32 0.0, %v1596
    %v1598 = vpop.f32.mrf.mxu0
    %v1599 = vpop.f32.mrf.mxu0
    %v1600 = vadd.f32 0.0, %v1599
    %v1601 = vpop.f32.mrf.mxu0
    %1602 = vmatprep.mubr.bf16.mxu0 0
    %1603 = vmatmul.mubr.bf16.gmra.mxu0 %v1534
    %v1604 = vpop.f32.mrf.mxu0
    %v1605 = vadd.f32 0.0, %v1604
    %v1606 = vpop.f32.mrf.mxu0
    %v1607 = vpop.f32.mrf.mxu0
    %v1608 = vadd.f32 0.0, %v1607
    %v1609 = vpop.f32.mrf.mxu0
    %1610 = vmatprep.mubr.bf16.mxu0 0
    %1611 = vmatmul.mubr.bf16.gmra.mxu0 %v1535
    %v1612 = vpop.f32.mrf.mxu0
    %v1613 = vadd.f32 0.0, %v1612
    %v1614 = vpop.f32.mrf.mxu0
    %v1615 = vpop.f32.mrf.mxu0
    %v1616 = vadd.f32 0.0, %v1615
    %v1617 = vpop.f32.mrf.mxu0
    %1618 = vmatprep.mubr.bf16.mxu0 0
    %1619 = vmatmul.mubr.bf16.gmra.mxu0 %v1536
    %v1620 = vpop.f32.mrf.mxu0
    %v1621 = vadd.f32 0.0, %v1620
    %v1622 = vpop.f32.mrf.mxu0
    %v1623 = vpop.f32.mrf.mxu0
    %v1624 = vadd.f32 0.0, %v1623
    %v1625 = vpop.f32.mrf.mxu0
    %1626 = vmatprep.mubr.bf16.mxu0 0
    %1627 = vmatmul.mubr.bf16.gmra.mxu0 %v1537
    %v1628 = vpop.f32.mrf.mxu0
    %v1629 = vadd.f32 0.0, %v1628
    %v1630 = vpop.f32.mrf.mxu0
    %v1631 = vpop.f32.mrf.mxu0
    %v1632 = vadd.f32 0.0, %v1631
    %v1633 = vpop.f32.mrf.mxu0
    %1634 = vdwg.mxu0
    %v1635 = vpack.c.bf16 %v1576, %v1573
    %v1636 = vpack.c.bf16 %v1584, %v1581
    %v1637 = vpack.c.bf16 %v1592, %v1589
    %v1638 = vpack.c.bf16 %v1600, %v1597
    %v1639 = vpack.c.bf16 %v1608, %v1605
    %v1640 = vpack.c.bf16 %v1616, %v1613
    %v1641 = vpack.c.bf16 %v1624, %v1621
    %v1642 = vpack.c.bf16 %v1632, %v1629
    %1643 = vmatprep.subr.bf16.mxu0 0
    %1644 = vmatpush1.bf16.msra.mxu0 %v820
    %1645 = vmatprep.subr.bf16.mxu0 0
    %1646 = vmatpush1.bf16.msra.mxu0 %v819
    %1647 = vmatprep.subr.bf16.mxu0 0
    %1648 = vmatpush1.bf16.msra.mxu0 %v818
    %1649 = vmatprep.subr.bf16.mxu0 0
    %1650 = vmatpush1.bf16.msra.mxu0 %v817
    %1651 = vmatprep.subr.bf16.mxu0 0
    %1652 = vmatpush1.bf16.msra.mxu0 %v816
    %1653 = vmatprep.subr.bf16.mxu0 0
    %1654 = vmatpush1.bf16.msra.mxu0 %v815
    %1655 = vmatprep.subr.bf16.mxu0 0
    %1656 = vmatpush1.bf16.msra.mxu0 %v814
    %1657 = vmatprep.subr.bf16.mxu0 0
    %1658 = vmatpush1.bf16.msra.mxu0 %v813
    %1659 = vmatprep.subr.bf16.mxu0 0
    %1660 = vmatpush2.bf16.msra.mxu0 0
    %1661 = vmatprep.subr.bf16.mxu0 0
    %1662 = vmatpush2.bf16.msra.mxu0 0
    %1663 = vmatprep.subr.bf16.mxu0 0
    %1664 = vmatpush2.bf16.msra.mxu0 0
    %1665 = vmatprep.subr.bf16.mxu0 0
    %1666 = vmatpush2.bf16.msra.mxu0 0
    %1667 = vmatprep.subr.bf16.mxu0 0
    %1668 = vmatpush2.bf16.msra.mxu0 0
    %1669 = vmatprep.subr.bf16.mxu0 0
    %1670 = vmatpush2.bf16.msra.mxu0 0
    %1671 = vmatprep.subr.bf16.mxu0 0
    %1672 = vmatpush2.bf16.msra.mxu0 0
    %1673 = vmatprep.subr.bf16.mxu0 0
    %1674 = vmatpush2.bf16.msra.mxu0 0
    %1675 = vmatprep.mubr.bf16.mxu0 0
    %1676 = vmatmul.mubr.bf16.gmra.mxu0 %v1635
    %v1677 = vpop.f32.mrf.mxu0
    %v1678 = vadd.f32 0.0, %v1677
    %v1679 = vpop.f32.mrf.mxu0
    %v1680 = vpop.f32.mrf.mxu0
    %v1681 = vadd.f32 0.0, %v1680
    %v1682 = vpop.f32.mrf.mxu0
    %1683 = vmatprep.mubr.bf16.mxu0 0
    %1684 = vmatmul.mubr.bf16.gmra.mxu0 %v1636
    %v1685 = vpop.f32.mrf.mxu0
    %v1686 = vadd.f32 0.0, %v1685
    %v1687 = vpop.f32.mrf.mxu0
    %v1688 = vpop.f32.mrf.mxu0
    %v1689 = vadd.f32 0.0, %v1688
    %v1690 = vpop.f32.mrf.mxu0
    %1691 = vmatprep.mubr.bf16.mxu0 0
    %1692 = vmatmul.mubr.bf16.gmra.mxu0 %v1637
    %v1693 = vpop.f32.mrf.mxu0
    %v1694 = vadd.f32 0.0, %v1693
    %v1695 = vpop.f32.mrf.mxu0
    %v1696 = vpop.f32.mrf.mxu0
    %v1697 = vadd.f32 0.0, %v1696
    %v1698 = vpop.f32.mrf.mxu0
    %1699 = vmatprep.mubr.bf16.mxu0 0
    %1700 = vmatmul.mubr.bf16.gmra.mxu0 %v1638
    %v1701 = vpop.f32.mrf.mxu0
    %v1702 = vadd.f32 0.0, %v1701
    %v1703 = vpop.f32.mrf.mxu0
    %v1704 = vpop.f32.mrf.mxu0
    %v1705 = vadd.f32 0.0, %v1704
    %v1706 = vpop.f32.mrf.mxu0
    %1707 = vmatprep.mubr.bf16.mxu0 0
    %1708 = vmatmul.mubr.bf16.gmra.mxu0 %v1639
    %v1709 = vpop.f32.mrf.mxu0
    %v1710 = vadd.f32 0.0, %v1709
    %v1711 = vpop.f32.mrf.mxu0
    %v1712 = vpop.f32.mrf.mxu0
    %v1713 = vadd.f32 0.0, %v1712
    %v1714 = vpop.f32.mrf.mxu0
    %1715 = vmatprep.mubr.bf16.mxu0 0
    %1716 = vmatmul.mubr.bf16.gmra.mxu0 %v1640
    %v1717 = vpop.f32.mrf.mxu0
    %v1718 = vadd.f32 0.0, %v1717
    %v1719 = vpop.f32.mrf.mxu0
    %v1720 = vpop.f32.mrf.mxu0
    %v1721 = vadd.f32 0.0, %v1720
    %v1722 = vpop.f32.mrf.mxu0
    %1723 = vmatprep.mubr.bf16.mxu0 0
    %1724 = vmatmul.mubr.bf16.gmra.mxu0 %v1641
    %v1725 = vpop.f32.mrf.mxu0
    %v1726 = vadd.f32 0.0, %v1725
    %v1727 = vpop.f32.mrf.mxu0
    %v1728 = vpop.f32.mrf.mxu0
    %v1729 = vadd.f32 0.0, %v1728
    %v1730 = vpop.f32.mrf.mxu0
    %1731 = vmatprep.mubr.bf16.mxu0 0
    %1732 = vmatmul.mubr.bf16.gmra.mxu0 %v1642
    %v1733 = vpop.f32.mrf.mxu0
    %v1734 = vadd.f32 0.0, %v1733
    %v1735 = vpop.f32.mrf.mxu0
    %v1736 = vpop.f32.mrf.mxu0
    %v1737 = vadd.f32 0.0, %v1736
    %v1738 = vpop.f32.mrf.mxu0
    %1739 = vdwg.mxu0
    %v1740 = vpack.c.bf16 %v1681, %v1678
    %v1741 = vpack.c.bf16 %v1689, %v1686
    %v1742 = vpack.c.bf16 %v1697, %v1694
    %v1743 = vpack.c.bf16 %v1705, %v1702
    %v1744 = vpack.c.bf16 %v1713, %v1710
    %v1745 = vpack.c.bf16 %v1721, %v1718
    %v1746 = vpack.c.bf16 %v1729, %v1726
    %v1747 = vpack.c.bf16 %v1737, %v1734
    %1748 = vmatprep.subr.bf16.mxu0 0
    %1749 = vmatpush1.bf16.msra.mxu0 %v989
    %1750 = vmatprep.subr.bf16.mxu0 0
    %1751 = vmatpush1.bf16.msra.mxu0 %v988
    %1752 = vmatprep.subr.bf16.mxu0 0
    %1753 = vmatpush1.bf16.msra.mxu0 %v987
    %1754 = vmatprep.subr.bf16.mxu0 0
    %1755 = vmatpush1.bf16.msra.mxu0 %v986
    %1756 = vmatprep.subr.bf16.mxu0 0
    %1757 = vmatpush1.bf16.msra.mxu0 %v985
    %1758 = vmatprep.subr.bf16.mxu0 0
    %1759 = vmatpush1.bf16.msra.mxu0 %v984
    %1760 = vmatprep.subr.bf16.mxu0 0
    %1761 = vmatpush1.bf16.msra.mxu0 %v983
    %1762 = vmatprep.subr.bf16.mxu0 0
    %1763 = vmatpush1.bf16.msra.mxu0 %v982
    %1764 = vmatprep.subr.bf16.mxu0 0
    %1765 = vmatpush2.bf16.msra.mxu0 0
    %1766 = vmatprep.subr.bf16.mxu0 0
    %1767 = vmatpush2.bf16.msra.mxu0 0
    %1768 = vmatprep.subr.bf16.mxu0 0
    %1769 = vmatpush2.bf16.msra.mxu0 0
    %1770 = vmatprep.subr.bf16.mxu0 0
    %1771 = vmatpush2.bf16.msra.mxu0 0
    %1772 = vmatprep.subr.bf16.mxu0 0
    %1773 = vmatpush2.bf16.msra.mxu0 0
    %1774 = vmatprep.subr.bf16.mxu0 0
    %1775 = vmatpush2.bf16.msra.mxu0 0
    %1776 = vmatprep.subr.bf16.mxu0 0
    %1777 = vmatpush2.bf16.msra.mxu0 0
    %1778 = vmatprep.subr.bf16.mxu0 0
    %1779 = vmatpush2.bf16.msra.mxu0 0
    %1780 = vmatprep.mubr.bf16.mxu0 0
    %1781 = vmatmul.mubr.bf16.gmra.mxu0 %v1740
    %v1782 = vpop.f32.mrf.mxu0
    %v1783 = vadd.f32 0.0, %v1782
    %v1784 = vpop.f32.mrf.mxu0
    %v1785 = vpop.f32.mrf.mxu0
    %v1786 = vadd.f32 0.0, %v1785
    %v1787 = vpop.f32.mrf.mxu0
    %1788 = vmatprep.mubr.bf16.mxu0 0
    %1789 = vmatmul.mubr.bf16.gmra.mxu0 %v1741
    %v1790 = vpop.f32.mrf.mxu0
    %v1791 = vadd.f32 0.0, %v1790
    %v1792 = vpop.f32.mrf.mxu0
    %v1793 = vpop.f32.mrf.mxu0
    %v1794 = vadd.f32 0.0, %v1793
    %v1795 = vpop.f32.mrf.mxu0
    %1796 = vmatprep.mubr.bf16.mxu0 0
    %1797 = vmatmul.mubr.bf16.gmra.mxu0 %v1742
    %v1798 = vpop.f32.mrf.mxu0
    %v1799 = vadd.f32 0.0, %v1798
    %v1800 = vpop.f32.mrf.mxu0
    %v1801 = vpop.f32.mrf.mxu0
    %v1802 = vadd.f32 0.0, %v1801
    %v1803 = vpop.f32.mrf.mxu0
    %1804 = vmatprep.mubr.bf16.mxu0 0
    %1805 = vmatmul.mubr.bf16.gmra.mxu0 %v1743
    %v1806 = vpop.f32.mrf.mxu0
    %v1807 = vadd.f32 0.0, %v1806
    %v1808 = vpop.f32.mrf.mxu0
    %v1809 = vpop.f32.mrf.mxu0
    %v1810 = vadd.f32 0.0, %v1809
    %v1811 = vpop.f32.mrf.mxu0
    %1812 = vmatprep.mubr.bf16.mxu0 0
    %1813 = vmatmul.mubr.bf16.gmra.mxu0 %v1744
    %v1814 = vpop.f32.mrf.mxu0
    %v1815 = vadd.f32 0.0, %v1814
    %v1816 = vpop.f32.mrf.mxu0
    %v1817 = vpop.f32.mrf.mxu0
    %v1818 = vadd.f32 0.0, %v1817
    %v1819 = vpop.f32.mrf.mxu0
    %1820 = vmatprep.mubr.bf16.mxu0 0
    %1821 = vmatmul.mubr.bf16.gmra.mxu0 %v1745
    %v1822 = vpop.f32.mrf.mxu0
    %v1823 = vadd.f32 0.0, %v1822
    %v1824 = vpop.f32.mrf.mxu0
    %v1825 = vpop.f32.mrf.mxu0
    %v1826 = vadd.f32 0.0, %v1825
    %v1827 = vpop.f32.mrf.mxu0
    %1828 = vmatprep.mubr.bf16.mxu0 0
    %1829 = vmatmul.mubr.bf16.gmra.mxu0 %v1746
    %v1830 = vpop.f32.mrf.mxu0
    %v1831 = vadd.f32 0.0, %v1830
    %v1832 = vpop.f32.mrf.mxu0
    %v1833 = vpop.f32.mrf.mxu0
    %v1834 = vadd.f32 0.0, %v1833
    %v1835 = vpop.f32.mrf.mxu0
    %1836 = vmatprep.mubr.bf16.mxu0 0
    %1837 = vmatmul.mubr.bf16.gmra.mxu0 %v1747
    %v1838 = vpop.f32.mrf.mxu0
    %v1839 = vadd.f32 0.0, %v1838
    %v1840 = vpop.f32.mrf.mxu0
    %v1841 = vpop.f32.mrf.mxu0
    %v1842 = vadd.f32 0.0, %v1841
    %v1843 = vpop.f32.mrf.mxu0
    %1844 = vdwg.mxu0
    %v1845 = vpack.c.bf16 %v1786, %v1783
    %v1846 = vpack.c.bf16 %v1794, %v1791
    %v1847 = vpack.c.bf16 %v1802, %v1799
    %v1848 = vpack.c.bf16 %v1810, %v1807
    %v1849 = vpack.c.bf16 %v1818, %v1815
    %v1850 = vpack.c.bf16 %v1826, %v1823
    %v1851 = vpack.c.bf16 %v1834, %v1831
    %v1852 = vpack.c.bf16 %v1842, %v1839
    %1853 = vmatprep.subr.bf16.mxu0 %v1182
    %1854 = vmatpush1.bf16.msra.mxu0 %v1181
    %1855 = vmatprep.subr.bf16.mxu0 %v1180
    %1856 = vmatpush1.bf16.msra.mxu0 %v1179
    %1857 = vmatprep.subr.bf16.mxu0 %v1178
    %1858 = vmatpush1.bf16.msra.mxu0 %v1177
    %1859 = vmatprep.subr.bf16.mxu0 %v1176
    %1860 = vmatpush1.bf16.msra.mxu0 %v1175
    %1861 = vmatprep.subr.bf16.mxu0 %v1174
    %1862 = vmatpush1.bf16.msra.mxu0 %v1173
    %1863 = vmatprep.subr.bf16.mxu0 %v1172
    %1864 = vmatpush1.bf16.msra.mxu0 %v1171
    %1865 = vmatprep.subr.bf16.mxu0 %v1170
    %1866 = vmatpush1.bf16.msra.mxu0 %v1169
    %1867 = vmatprep.subr.bf16.mxu0 %v1168
    %1868 = vmatpush1.bf16.msra.mxu0 %v1167
    %1869 = vmatprep.subr.bf16.mxu0 0
    %1870 = vmatpush2.bf16.msra.mxu0 0
    %1871 = vmatprep.subr.bf16.mxu0 0
    %1872 = vmatpush2.bf16.msra.mxu0 0
    %1873 = vmatprep.subr.bf16.mxu0 0
    %1874 = vmatpush2.bf16.msra.mxu0 0
    %1875 = vmatprep.subr.bf16.mxu0 0
    %1876 = vmatpush2.bf16.msra.mxu0 0
    %1877 = vmatprep.subr.bf16.mxu0 0
    %1878 = vmatpush2.bf16.msra.mxu0 0
    %1879 = vmatprep.subr.bf16.mxu0 0
    %1880 = vmatpush2.bf16.msra.mxu0 0
    %1881 = vmatprep.subr.bf16.mxu0 0
    %1882 = vmatpush2.bf16.msra.mxu0 0
    %1883 = vmatprep.subr.bf16.mxu0 0
    %1884 = vmatpush2.bf16.msra.mxu0 0
    %1885 = vmatprep.mubr.bf16.mxu0 0
    %1886 = vmatmul.mubr.bf16.gmra.mxu0 %v1845
    %v1887 = vpop.f32.mrf.mxu0
    %v1888 = vadd.f32 0.0, %v1887
    %v1889 = vpop.f32.mrf.mxu0
    %v1890 = vadd.f32 0.0, %v1889
    %v1891 = vpop.f32.mrf.mxu0
    %v1892 = vadd.f32 0.0, %v1891
    %v1893 = vpop.f32.mrf.mxu0
    %v1894 = vadd.f32 0.0, %v1893
    %1895 = vmatprep.mubr.bf16.mxu0 0
    %1896 = vmatmul.mubr.bf16.gmra.mxu0 %v1846
    %v1897 = vpop.f32.mrf.mxu0
    %v1898 = vadd.f32 0.0, %v1897
    %v1899 = vpop.f32.mrf.mxu0
    %v1900 = vadd.f32 0.0, %v1899
    %v1901 = vpop.f32.mrf.mxu0
    %v1902 = vadd.f32 0.0, %v1901
    %v1903 = vpop.f32.mrf.mxu0
    %v1904 = vadd.f32 0.0, %v1903
    %1905 = vmatprep.mubr.bf16.mxu0 0
    %1906 = vmatmul.mubr.bf16.gmra.mxu0 %v1847
    %v1907 = vpop.f32.mrf.mxu0
    %v1908 = vadd.f32 0.0, %v1907
    %v1909 = vpop.f32.mrf.mxu0
    %v1910 = vadd.f32 0.0, %v1909
    %v1911 = vpop.f32.mrf.mxu0
    %v1912 = vadd.f32 0.0, %v1911
    %v1913 = vpop.f32.mrf.mxu0
    %v1914 = vadd.f32 0.0, %v1913
    %1915 = vmatprep.mubr.bf16.mxu0 0
    %1916 = vmatmul.mubr.bf16.gmra.mxu0 %v1848
    %v1917 = vpop.f32.mrf.mxu0
    %v1918 = vadd.f32 0.0, %v1917
    %v1919 = vpop.f32.mrf.mxu0
    %v1920 = vadd.f32 0.0, %v1919
    %v1921 = vpop.f32.mrf.mxu0
    %v1922 = vadd.f32 0.0, %v1921
    %v1923 = vpop.f32.mrf.mxu0
    %v1924 = vadd.f32 0.0, %v1923
    %1925 = vmatprep.mubr.bf16.mxu0 0
    %1926 = vmatmul.mubr.bf16.gmra.mxu0 %v1849
    %v1927 = vpop.f32.mrf.mxu0
    %v1928 = vadd.f32 0.0, %v1927
    %v1929 = vpop.f32.mrf.mxu0
    %v1930 = vadd.f32 0.0, %v1929
    %v1931 = vpop.f32.mrf.mxu0
    %v1932 = vadd.f32 0.0, %v1931
    %v1933 = vpop.f32.mrf.mxu0
    %v1934 = vadd.f32 0.0, %v1933
    %1935 = vmatprep.mubr.bf16.mxu0 0
    %1936 = vmatmul.mubr.bf16.gmra.mxu0 %v1850
    %v1937 = vpop.f32.mrf.mxu0
    %v1938 = vadd.f32 0.0, %v1937
    %v1939 = vpop.f32.mrf.mxu0
    %v1940 = vadd.f32 0.0, %v1939
    %v1941 = vpop.f32.mrf.mxu0
    %v1942 = vadd.f32 0.0, %v1941
    %v1943 = vpop.f32.mrf.mxu0
    %v1944 = vadd.f32 0.0, %v1943
    %1945 = vmatprep.mubr.bf16.mxu0 0
    %1946 = vmatmul.mubr.bf16.gmra.mxu0 %v1851
    %v1947 = vpop.f32.mrf.mxu0
    %v1948 = vadd.f32 0.0, %v1947
    %v1949 = vpop.f32.mrf.mxu0
    %v1950 = vadd.f32 0.0, %v1949
    %v1951 = vpop.f32.mrf.mxu0
    %v1952 = vadd.f32 0.0, %v1951
    %v1953 = vpop.f32.mrf.mxu0
    %v1954 = vadd.f32 0.0, %v1953
    %1955 = vmatprep.mubr.bf16.mxu0 0
    %1956 = vmatmul.mubr.bf16.gmra.mxu0 %v1852
    %v1957 = vpop.f32.mrf.mxu0
    %v1958 = vadd.f32 0.0, %v1957
    %v1959 = vpop.f32.mrf.mxu0
    %v1960 = vadd.f32 0.0, %v1959
    %v1961 = vpop.f32.mrf.mxu0
    %v1962 = vadd.f32 0.0, %v1961
    %v1963 = vpop.f32.mrf.mxu0
    %v1964 = vadd.f32 0.0, %v1963
    %1965 = vdwg.mxu0
    %v1966 = vpack.c.bf16 %v1892, %v1888
    %v1967 = vpack.c.bf16 %v1894, %v1890
    %v1968 = vpack.c.bf16 %v1902, %v1898
    %v1969 = vpack.c.bf16 %v1904, %v1900
    %v1970 = vpack.c.bf16 %v1912, %v1908
    %v1971 = vpack.c.bf16 %v1914, %v1910
    %v1972 = vpack.c.bf16 %v1922, %v1918
    %v1973 = vpack.c.bf16 %v1924, %v1920
    %v1974 = vpack.c.bf16 %v1932, %v1928
    %v1975 = vpack.c.bf16 %v1934, %v1930
    %v1976 = vpack.c.bf16 %v1942, %v1938
    %v1977 = vpack.c.bf16 %v1944, %v1940
    %v1978 = vpack.c.bf16 %v1952, %v1948
    %v1979 = vpack.c.bf16 %v1954, %v1950
    %v1980 = vpack.c.bf16 %v1962, %v1958
    %v1981 = vpack.c.bf16 %v1964, %v1960
    %1982 = vmatprep.subr.bf16.mxu0 0
    %1983 = vmatpush1.bf16.msra.mxu0 %v297
    %1984 = vmatprep.subr.bf16.mxu0 0
    %1985 = vmatpush1.bf16.msra.mxu0 %v296
    %1986 = vmatprep.subr.bf16.mxu0 0
    %1987 = vmatpush1.bf16.msra.mxu0 %v295
    %1988 = vmatprep.subr.bf16.mxu0 0
    %1989 = vmatpush1.bf16.msra.mxu0 %v294
    %1990 = vmatprep.subr.bf16.mxu0 0
    %1991 = vmatpush1.bf16.msra.mxu0 %v293
    %1992 = vmatprep.subr.bf16.mxu0 0
    %1993 = vmatpush1.bf16.msra.mxu0 %v292
    %1994 = vmatprep.subr.bf16.mxu0 0
    %1995 = vmatpush1.bf16.msra.mxu0 %v291
    %1996 = vmatprep.subr.bf16.mxu0 0
    %1997 = vmatpush1.bf16.msra.mxu0 %v290
    %1998 = vmatprep.subr.bf16.mxu0 0
    %1999 = vmatpush2.bf16.msra.mxu0 %v305
    %2000 = vmatprep.subr.bf16.mxu0 0
    %2001 = vmatpush2.bf16.msra.mxu0 %v304
    %2002 = vmatprep.subr.bf16.mxu0 0
    %2003 = vmatpush2.bf16.msra.mxu0 %v303
    %2004 = vmatprep.subr.bf16.mxu0 0
    %2005 = vmatpush2.bf16.msra.mxu0 %v302
    %2006 = vmatprep.subr.bf16.mxu0 0
    %2007 = vmatpush2.bf16.msra.mxu0 %v301
    %2008 = vmatprep.subr.bf16.mxu0 0
    %2009 = vmatpush2.bf16.msra.mxu0 %v300
    %2010 = vmatprep.subr.bf16.mxu0 0
    %2011 = vmatpush2.bf16.msra.mxu0 %v299
    %2012 = vmatprep.subr.bf16.mxu0 0
    %2013 = vmatpush2.bf16.msra.mxu0 %v298
    %2014 = vmatprep.mubr.bf16.mxu0 %v1967
    %2015 = vmatmul.mubr.bf16.gmra.mxu0 %v1966
    %v2016 = vpop.f32.mrf.mxu0
    %v2017 = vadd.f32 0.0, %v2016
    %v2018 = vpop.f32.mrf.mxu0
    %v2019 = vpop.f32.mrf.mxu0
    %v2020 = vadd.f32 0.0, %v2019
    %v2021 = vpop.f32.mrf.mxu0
    %2022 = vmatprep.mubr.bf16.mxu0 %v1969
    %2023 = vmatmul.mubr.bf16.gmra.mxu0 %v1968
    %v2024 = vpop.f32.mrf.mxu0
    %v2025 = vadd.f32 0.0, %v2024
    %v2026 = vpop.f32.mrf.mxu0
    %v2027 = vpop.f32.mrf.mxu0
    %v2028 = vadd.f32 0.0, %v2027
    %v2029 = vpop.f32.mrf.mxu0
    %2030 = vmatprep.mubr.bf16.mxu0 %v1971
    %2031 = vmatmul.mubr.bf16.gmra.mxu0 %v1970
    %v2032 = vpop.f32.mrf.mxu0
    %v2033 = vadd.f32 0.0, %v2032
    %v2034 = vpop.f32.mrf.mxu0
    %v2035 = vpop.f32.mrf.mxu0
    %v2036 = vadd.f32 0.0, %v2035
    %v2037 = vpop.f32.mrf.mxu0
    %2038 = vmatprep.mubr.bf16.mxu0 %v1973
    %2039 = vmatmul.mubr.bf16.gmra.mxu0 %v1972
    %v2040 = vpop.f32.mrf.mxu0
    %v2041 = vadd.f32 0.0, %v2040
    %v2042 = vpop.f32.mrf.mxu0
    %v2043 = vpop.f32.mrf.mxu0
    %v2044 = vadd.f32 0.0, %v2043
    %v2045 = vpop.f32.mrf.mxu0
    %2046 = vmatprep.mubr.bf16.mxu0 %v1975
    %2047 = vmatmul.mubr.bf16.gmra.mxu0 %v1974
    %v2048 = vpop.f32.mrf.mxu0
    %v2049 = vadd.f32 0.0, %v2048
    %v2050 = vpop.f32.mrf.mxu0
    %v2051 = vpop.f32.mrf.mxu0
    %v2052 = vadd.f32 0.0, %v2051
    %v2053 = vpop.f32.mrf.mxu0
    %2054 = vmatprep.mubr.bf16.mxu0 %v1977
    %2055 = vmatmul.mubr.bf16.gmra.mxu0 %v1976
    %v2056 = vpop.f32.mrf.mxu0
    %v2057 = vadd.f32 0.0, %v2056
    %v2058 = vpop.f32.mrf.mxu0
    %v2059 = vpop.f32.mrf.mxu0
    %v2060 = vadd.f32 0.0, %v2059
    %v2061 = vpop.f32.mrf.mxu0
    %2062 = vmatprep.mubr.bf16.mxu0 %v1979
    %2063 = vmatmul.mubr.bf16.gmra.mxu0 %v1978
    %v2064 = vpop.f32.mrf.mxu0
    %v2065 = vadd.f32 0.0, %v2064
    %v2066 = vpop.f32.mrf.mxu0
    %v2067 = vpop.f32.mrf.mxu0
    %v2068 = vadd.f32 0.0, %v2067
    %v2069 = vpop.f32.mrf.mxu0
    %2070 = vmatprep.mubr.bf16.mxu0 %v1981
    %2071 = vmatmul.mubr.bf16.gmra.mxu0 %v1980
    %v2072 = vpop.f32.mrf.mxu0
    %v2073 = vadd.f32 0.0, %v2072
    %v2074 = vpop.f32.mrf.mxu0
    %v2075 = vpop.f32.mrf.mxu0
    %v2076 = vadd.f32 0.0, %v2075
    %v2077 = vpop.f32.mrf.mxu0
    %2078 = vdwg.mxu0
    %v2079 = vpack.c.bf16 %v2020, %v2017
    %v2080 = vpack.c.bf16 %v2028, %v2025
    %v2081 = vpack.c.bf16 %v2036, %v2033
    %v2082 = vpack.c.bf16 %v2044, %v2041
    %v2083 = vpack.c.bf16 %v2052, %v2049
    %v2084 = vpack.c.bf16 %v2060, %v2057
    %v2085 = vpack.c.bf16 %v2068, %v2065
    %v2086 = vpack.c.bf16 %v2076, %v2073
    %2087 = vmatprep.subr.bf16.mxu0 0
    %2088 = vmatpush1.bf16.msra.mxu0 %v482
    %2089 = vmatprep.subr.bf16.mxu0 0
    %2090 = vmatpush1.bf16.msra.mxu0 %v481
    %2091 = vmatprep.subr.bf16.mxu0 0
    %2092 = vmatpush1.bf16.msra.mxu0 %v480
    %2093 = vmatprep.subr.bf16.mxu0 0
    %2094 = vmatpush1.bf16.msra.mxu0 %v479
    %2095 = vmatprep.subr.bf16.mxu0 0
    %2096 = vmatpush1.bf16.msra.mxu0 %v478
    %2097 = vmatprep.subr.bf16.mxu0 0
    %2098 = vmatpush1.bf16.msra.mxu0 %v477
    %2099 = vmatprep.subr.bf16.mxu0 0
    %2100 = vmatpush1.bf16.msra.mxu0 %v476
    %2101 = vmatprep.subr.bf16.mxu0 0
    %2102 = vmatpush1.bf16.msra.mxu0 %v475
    %2103 = vmatprep.subr.bf16.mxu0 0
    %2104 = vmatpush2.bf16.msra.mxu0 0
    %2105 = vmatprep.subr.bf16.mxu0 0
    %2106 = vmatpush2.bf16.msra.mxu0 0
    %2107 = vmatprep.subr.bf16.mxu0 0
    %2108 = vmatpush2.bf16.msra.mxu0 0
    %2109 = vmatprep.subr.bf16.mxu0 0
    %2110 = vmatpush2.bf16.msra.mxu0 0
    %2111 = vmatprep.subr.bf16.mxu0 0
    %2112 = vmatpush2.bf16.msra.mxu0 0
    %2113 = vmatprep.subr.bf16.mxu0 0
    %2114 = vmatpush2.bf16.msra.mxu0 0
    %2115 = vmatprep.subr.bf16.mxu0 0
    %2116 = vmatpush2.bf16.msra.mxu0 0
    %2117 = vmatprep.subr.bf16.mxu0 0
    %2118 = vmatpush2.bf16.msra.mxu0 0
    %2119 = vmatprep.mubr.bf16.mxu0 0
    %2120 = vmatmul.mubr.bf16.gmra.mxu0 %v2079
    %v2121 = vpop.f32.mrf.mxu0
    %v2122 = vadd.f32 0.0, %v2121
    %v2123 = vpop.f32.mrf.mxu0
    %v2124 = vpop.f32.mrf.mxu0
    %v2125 = vadd.f32 0.0, %v2124
    %v2126 = vpop.f32.mrf.mxu0
    %2127 = vmatprep.mubr.bf16.mxu0 0
    %2128 = vmatmul.mubr.bf16.gmra.mxu0 %v2080
    %v2129 = vpop.f32.mrf.mxu0
    %v2130 = vadd.f32 0.0, %v2129
    %v2131 = vpop.f32.mrf.mxu0
    %v2132 = vpop.f32.mrf.mxu0
    %v2133 = vadd.f32 0.0, %v2132
    %v2134 = vpop.f32.mrf.mxu0
    %2135 = vmatprep.mubr.bf16.mxu0 0
    %2136 = vmatmul.mubr.bf16.gmra.mxu0 %v2081
    %v2137 = vpop.f32.mrf.mxu0
    %v2138 = vadd.f32 0.0, %v2137
    %v2139 = vpop.f32.mrf.mxu0
    %v2140 = vpop.f32.mrf.mxu0
    %v2141 = vadd.f32 0.0, %v2140
    %v2142 = vpop.f32.mrf.mxu0
    %2143 = vmatprep.mubr.bf16.mxu0 0
    %2144 = vmatmul.mubr.bf16.gmra.mxu0 %v2082
    %v2145 = vpop.f32.mrf.mxu0
    %v2146 = vadd.f32 0.0, %v2145
    %v2147 = vpop.f32.mrf.mxu0
    %v2148 = vpop.f32.mrf.mxu0
    %v2149 = vadd.f32 0.0, %v2148
    %v2150 = vpop.f32.mrf.mxu0
    %2151 = vmatprep.mubr.bf16.mxu0 0
    %2152 = vmatmul.mubr.bf16.gmra.mxu0 %v2083
    %v2153 = vpop.f32.mrf.mxu0
    %v2154 = vadd.f32 0.0, %v2153
    %v2155 = vpop.f32.mrf.mxu0
    %v2156 = vpop.f32.mrf.mxu0
    %v2157 = vadd.f32 0.0, %v2156
    %v2158 = vpop.f32.mrf.mxu0
    %2159 = vmatprep.mubr.bf16.mxu0 0
    %2160 = vmatmul.mubr.bf16.gmra.mxu0 %v2084
    %v2161 = vpop.f32.mrf.mxu0
    %v2162 = vadd.f32 0.0, %v2161
    %v2163 = vpop.f32.mrf.mxu0
    %v2164 = vpop.f32.mrf.mxu0
    %v2165 = vadd.f32 0.0, %v2164
    %v2166 = vpop.f32.mrf.mxu0
    %2167 = vmatprep.mubr.bf16.mxu0 0
    %2168 = vmatmul.mubr.bf16.gmra.mxu0 %v2085
    %v2169 = vpop.f32.mrf.mxu0
    %v2170 = vadd.f32 0.0, %v2169
    %v2171 = vpop.f32.mrf.mxu0
    %v2172 = vpop.f32.mrf.mxu0
    %v2173 = vadd.f32 0.0, %v2172
    %v2174 = vpop.f32.mrf.mxu0
    %2175 = vmatprep.mubr.bf16.mxu0 0
    %2176 = vmatmul.mubr.bf16.gmra.mxu0 %v2086
    %v2177 = vpop.f32.mrf.mxu0
    %v2178 = vadd.f32 0.0, %v2177
    %v2179 = vpop.f32.mrf.mxu0
    %v2180 = vpop.f32.mrf.mxu0
    %v2181 = vadd.f32 0.0, %v2180
    %v2182 = vpop.f32.mrf.mxu0
    %2183 = vdwg.mxu0
    %v2184 = vpack.c.bf16 %v2125, %v2122
    %v2185 = vpack.c.bf16 %v2133, %v2130
    %v2186 = vpack.c.bf16 %v2141, %v2138
    %v2187 = vpack.c.bf16 %v2149, %v2146
    %v2188 = vpack.c.bf16 %v2157, %v2154
    %v2189 = vpack.c.bf16 %v2165, %v2162
    %v2190 = vpack.c.bf16 %v2173, %v2170
    %v2191 = vpack.c.bf16 %v2181, %v2178
    %2192 = vmatprep.subr.bf16.mxu0 0
    %2193 = vmatpush1.bf16.msra.mxu0 %v651
    %2194 = vmatprep.subr.bf16.mxu0 0
    %2195 = vmatpush1.bf16.msra.mxu0 %v650
    %2196 = vmatprep.subr.bf16.mxu0 0
    %2197 = vmatpush1.bf16.msra.mxu0 %v649
    %2198 = vmatprep.subr.bf16.mxu0 0
    %2199 = vmatpush1.bf16.msra.mxu0 %v648
    %2200 = vmatprep.subr.bf16.mxu0 0
    %2201 = vmatpush1.bf16.msra.mxu0 %v647
    %2202 = vmatprep.subr.bf16.mxu0 0
    %2203 = vmatpush1.bf16.msra.mxu0 %v646
    %2204 = vmatprep.subr.bf16.mxu0 0
    %2205 = vmatpush1.bf16.msra.mxu0 %v645
    %2206 = vmatprep.subr.bf16.mxu0 0
    %2207 = vmatpush1.bf16.msra.mxu0 %v644
    %2208 = vmatprep.subr.bf16.mxu0 0
    %2209 = vmatpush2.bf16.msra.mxu0 0
    %2210 = vmatprep.subr.bf16.mxu0 0
    %2211 = vmatpush2.bf16.msra.mxu0 0
    %2212 = vmatprep.subr.bf16.mxu0 0
    %2213 = vmatpush2.bf16.msra.mxu0 0
    %2214 = vmatprep.subr.bf16.mxu0 0
    %2215 = vmatpush2.bf16.msra.mxu0 0
    %2216 = vmatprep.subr.bf16.mxu0 0
    %2217 = vmatpush2.bf16.msra.mxu0 0
    %2218 = vmatprep.subr.bf16.mxu0 0
    %2219 = vmatpush2.bf16.msra.mxu0 0
    %2220 = vmatprep.subr.bf16.mxu0 0
    %2221 = vmatpush2.bf16.msra.mxu0 0
    %2222 = vmatprep.subr.bf16.mxu0 0
    %2223 = vmatpush2.bf16.msra.mxu0 0
    %2224 = vmatprep.mubr.bf16.mxu0 0
    %2225 = vmatmul.mubr.bf16.gmra.mxu0 %v2184
    %v2226 = vpop.f32.mrf.mxu0
    %v2227 = vadd.f32 0.0, %v2226
    %v2228 = vpop.f32.mrf.mxu0
    %v2229 = vpop.f32.mrf.mxu0
    %v2230 = vadd.f32 0.0, %v2229
    %v2231 = vpop.f32.mrf.mxu0
    %2232 = vmatprep.mubr.bf16.mxu0 0
    %2233 = vmatmul.mubr.bf16.gmra.mxu0 %v2185
    %v2234 = vpop.f32.mrf.mxu0
    %v2235 = vadd.f32 0.0, %v2234
    %v2236 = vpop.f32.mrf.mxu0
    %v2237 = vpop.f32.mrf.mxu0
    %v2238 = vadd.f32 0.0, %v2237
    %v2239 = vpop.f32.mrf.mxu0
    %2240 = vmatprep.mubr.bf16.mxu0 0
    %2241 = vmatmul.mubr.bf16.gmra.mxu0 %v2186
    %v2242 = vpop.f32.mrf.mxu0
    %v2243 = vadd.f32 0.0, %v2242
    %v2244 = vpop.f32.mrf.mxu0
    %v2245 = vpop.f32.mrf.mxu0
    %v2246 = vadd.f32 0.0, %v2245
    %v2247 = vpop.f32.mrf.mxu0
    %2248 = vmatprep.mubr.bf16.mxu0 0
    %2249 = vmatmul.mubr.bf16.gmra.mxu0 %v2187
    %v2250 = vpop.f32.mrf.mxu0
    %v2251 = vadd.f32 0.0, %v2250
    %v2252 = vpop.f32.mrf.mxu0
    %v2253 = vpop.f32.mrf.mxu0
    %v2254 = vadd.f32 0.0, %v2253
    %v2255 = vpop.f32.mrf.mxu0
    %2256 = vmatprep.mubr.bf16.mxu0 0
    %2257 = vmatmul.mubr.bf16.gmra.mxu0 %v2188
    %v2258 = vpop.f32.mrf.mxu0
    %v2259 = vadd.f32 0.0, %v2258
    %v2260 = vpop.f32.mrf.mxu0
    %v2261 = vpop.f32.mrf.mxu0
    %v2262 = vadd.f32 0.0, %v2261
    %v2263 = vpop.f32.mrf.mxu0
    %2264 = vmatprep.mubr.bf16.mxu0 0
    %2265 = vmatmul.mubr.bf16.gmra.mxu0 %v2189
    %v2266 = vpop.f32.mrf.mxu0
    %v2267 = vadd.f32 0.0, %v2266
    %v2268 = vpop.f32.mrf.mxu0
    %v2269 = vpop.f32.mrf.mxu0
    %v2270 = vadd.f32 0.0, %v2269
    %v2271 = vpop.f32.mrf.mxu0
    %2272 = vmatprep.mubr.bf16.mxu0 0
    %2273 = vmatmul.mubr.bf16.gmra.mxu0 %v2190
    %v2274 = vpop.f32.mrf.mxu0
    %v2275 = vadd.f32 0.0, %v2274
    %v2276 = vpop.f32.mrf.mxu0
    %v2277 = vpop.f32.mrf.mxu0
    %v2278 = vadd.f32 0.0, %v2277
    %v2279 = vpop.f32.mrf.mxu0
    %2280 = vmatprep.mubr.bf16.mxu0 0
    %2281 = vmatmul.mubr.bf16.gmra.mxu0 %v2191
    %v2282 = vpop.f32.mrf.mxu0
    %v2283 = vadd.f32 0.0, %v2282
    %v2284 = vpop.f32.mrf.mxu0
    %v2285 = vpop.f32.mrf.mxu0
    %v2286 = vadd.f32 0.0, %v2285
    %v2287 = vpop.f32.mrf.mxu0
    %2288 = vdwg.mxu0
    %v2289 = vpack.c.bf16 %v2230, %v2227
    %v2290 = vpack.c.bf16 %v2238, %v2235
    %v2291 = vpack.c.bf16 %v2246, %v2243
    %v2292 = vpack.c.bf16 %v2254, %v2251
    %v2293 = vpack.c.bf16 %v2262, %v2259
    %v2294 = vpack.c.bf16 %v2270, %v2267
    %v2295 = vpack.c.bf16 %v2278, %v2275
    %v2296 = vpack.c.bf16 %v2286, %v2283
    %v2297 = vld [vmem:[#allocation11] sm:$0xff]
    %v2298 = vld [vmem:[#allocation11 + $0x8] sm:$0xff]
    %v2299 = vld [vmem:[#allocation11 + $0x10] sm:$0xff]
    %v2300 = vld [vmem:[#allocation11 + $0x18] sm:$0xff]
    %v2301 = vld [vmem:[#allocation11 + $0x20] sm:$0xff]
    %v2302 = vld [vmem:[#allocation11 + $0x28] sm:$0xff]
    %v2303 = vld [vmem:[#allocation11 + $0x30] sm:$0xff]
    %v2304 = vld [vmem:[#allocation11 + $0x38] sm:$0xff]
    %v2305 = vld [vmem:[#allocation11 + $0x40] sm:$0xff]
    %v2306 = vld [vmem:[#allocation11 + $0x48] sm:$0xff]
    %v2307 = vld [vmem:[#allocation11 + $0x50] sm:$0xff]
    %v2308 = vld [vmem:[#allocation11 + $0x58] sm:$0xff]
    %v2309 = vld [vmem:[#allocation11 + $0x60] sm:$0xff]
    %v2310 = vld [vmem:[#allocation11 + $0x68] sm:$0xff]
    %v2311 = vld [vmem:[#allocation11 + $0x70] sm:$0xff]
    %v2312 = vld [vmem:[#allocation11 + $0x78] sm:$0xff]
    %v2329 = vunpack.c.l.b16 %v2297
    %v2330 = vunpack.c.h.b16 %v2297
    %v2331 = vunpack.c.l.b16 %v2298
    %v2332 = vunpack.c.h.b16 %v2298
    %v2333 = vunpack.c.l.b16 %v2299
    %v2334 = vunpack.c.h.b16 %v2299
    %v2335 = vunpack.c.l.b16 %v2300
    %v2336 = vunpack.c.h.b16 %v2300
    %v2337 = vunpack.c.l.b16 %v2301
    %v2338 = vunpack.c.h.b16 %v2301
    %v2339 = vunpack.c.l.b16 %v2302
    %v2340 = vunpack.c.h.b16 %v2302
    %v2341 = vunpack.c.l.b16 %v2303
    %v2342 = vunpack.c.h.b16 %v2303
    %v2343 = vunpack.c.l.b16 %v2304
    %v2344 = vunpack.c.h.b16 %v2304
    %v2345 = vunpack.c.l.b16 %v2305
    %v2346 = vunpack.c.h.b16 %v2305
    %v2347 = vunpack.c.l.b16 %v2306
    %v2348 = vunpack.c.h.b16 %v2306
    %v2349 = vunpack.c.l.b16 %v2307
    %v2350 = vunpack.c.h.b16 %v2307
    %v2351 = vunpack.c.l.b16 %v2308
    %v2352 = vunpack.c.h.b16 %v2308
    %v2353 = vunpack.c.l.b16 %v2309
    %v2354 = vunpack.c.h.b16 %v2309
    %v2355 = vunpack.c.l.b16 %v2310
    %v2356 = vunpack.c.h.b16 %v2310
    %v2357 = vunpack.c.l.b16 %v2311
    %v2358 = vunpack.c.h.b16 %v2311
    %v2359 = vunpack.c.l.b16 %v2312
    %v2360 = vunpack.c.h.b16 %v2312
    %v2361 = vpack.c.b16 %v2331, %v2329
    %v2362 = vpack.c.b16 %v2332, %v2330
    %v2363 = vpack.c.b16 %v2335, %v2333
    %v2364 = vpack.c.b16 %v2336, %v2334
    %v2365 = vpack.c.b16 %v2339, %v2337
    %v2366 = vpack.c.b16 %v2340, %v2338
    %v2367 = vpack.c.b16 %v2343, %v2341
    %v2368 = vpack.c.b16 %v2344, %v2342
    %v2369 = vpack.c.b16 %v2347, %v2345
    %v2370 = vpack.c.b16 %v2348, %v2346
    %v2371 = vpack.c.b16 %v2351, %v2349
    %v2372 = vpack.c.b16 %v2352, %v2350
    %v2373 = vpack.c.b16 %v2355, %v2353
    %v2374 = vpack.c.b16 %v2356, %v2354
    %v2375 = vpack.c.b16 %v2359, %v2357
    %v2376 = vpack.c.b16 %v2360, %v2358
    %2393 = vmatprep.subr.bf16.mxu0 %v2376
    %2394 = vmatpush1.bf16.msra.mxu0 %v2375
    %2395 = vmatprep.subr.bf16.mxu0 %v2374
    %2396 = vmatpush1.bf16.msra.mxu0 %v2373
    %2397 = vmatprep.subr.bf16.mxu0 %v2372
    %2398 = vmatpush1.bf16.msra.mxu0 %v2371
    %2399 = vmatprep.subr.bf16.mxu0 %v2370
    %2400 = vmatpush1.bf16.msra.mxu0 %v2369
    %2401 = vmatprep.subr.bf16.mxu0 %v2368
    %2402 = vmatpush1.bf16.msra.mxu0 %v2367
    %2403 = vmatprep.subr.bf16.mxu0 %v2366
    %2404 = vmatpush1.bf16.msra.mxu0 %v2365
    %2405 = vmatprep.subr.bf16.mxu0 %v2364
    %2406 = vmatpush1.bf16.msra.mxu0 %v2363
    %2407 = vmatprep.subr.bf16.mxu0 %v2362
    %2408 = vmatpush1.bf16.msra.mxu0 %v2361
    %2409 = vmatprep.subr.bf16.mxu0 0
    %2410 = vmatpush2.bf16.msra.mxu0 0
    %2411 = vmatprep.subr.bf16.mxu0 0
    %2412 = vmatpush2.bf16.msra.mxu0 0
    %2413 = vmatprep.subr.bf16.mxu0 0
    %2414 = vmatpush2.bf16.msra.mxu0 0
    %2415 = vmatprep.subr.bf16.mxu0 0
    %2416 = vmatpush2.bf16.msra.mxu0 0
    %2417 = vmatprep.subr.bf16.mxu0 0
    %2418 = vmatpush2.bf16.msra.mxu0 0
    %2419 = vmatprep.subr.bf16.mxu0 0
    %2420 = vmatpush2.bf16.msra.mxu0 0
    %2421 = vmatprep.subr.bf16.mxu0 0
    %2422 = vmatpush2.bf16.msra.mxu0 0
    %2423 = vmatprep.subr.bf16.mxu0 0
    %2424 = vmatpush2.bf16.msra.mxu0 0
    %2425 = vmatprep.mubr.bf16.mxu0 0
    %2426 = vmatmul.mubr.bf16.gmra.mxu0 %v2289
    %v2427 = vpop.f32.mrf.mxu0
    %v2428 = vadd.f32 0.0, %v2427
    %v2429 = vpop.f32.mrf.mxu0
    %v2430 = vadd.f32 0.0, %v2429
    %v2431 = vpop.f32.mrf.mxu0
    %v2432 = vadd.f32 0.0, %v2431
    %v2433 = vpop.f32.mrf.mxu0
    %v2434 = vadd.f32 0.0, %v2433
    %2435 = vmatprep.mubr.bf16.mxu0 0
    %2436 = vmatmul.mubr.bf16.gmra.mxu0 %v2290
    %v2437 = vpop.f32.mrf.mxu0
    %v2438 = vadd.f32 0.0, %v2437
    %v2439 = vpop.f32.mrf.mxu0
    %v2440 = vadd.f32 0.0, %v2439
    %v2441 = vpop.f32.mrf.mxu0
    %v2442 = vadd.f32 0.0, %v2441
    %v2443 = vpop.f32.mrf.mxu0
    %v2444 = vadd.f32 0.0, %v2443
    %2445 = vmatprep.mubr.bf16.mxu0 0
    %2446 = vmatmul.mubr.bf16.gmra.mxu0 %v2291
    %v2447 = vpop.f32.mrf.mxu0
    %v2448 = vadd.f32 0.0, %v2447
    %v2449 = vpop.f32.mrf.mxu0
    %v2450 = vadd.f32 0.0, %v2449
    %v2451 = vpop.f32.mrf.mxu0
    %v2452 = vadd.f32 0.0, %v2451
    %v2453 = vpop.f32.mrf.mxu0
    %v2454 = vadd.f32 0.0, %v2453
    %2455 = vmatprep.mubr.bf16.mxu0 0
    %2456 = vmatmul.mubr.bf16.gmra.mxu0 %v2292
    %v2457 = vpop.f32.mrf.mxu0
    %v2458 = vadd.f32 0.0, %v2457
    %v2459 = vpop.f32.mrf.mxu0
    %v2460 = vadd.f32 0.0, %v2459
    %v2461 = vpop.f32.mrf.mxu0
    %v2462 = vadd.f32 0.0, %v2461
    %v2463 = vpop.f32.mrf.mxu0
    %v2464 = vadd.f32 0.0, %v2463
    %2465 = vmatprep.mubr.bf16.mxu0 0
    %2466 = vmatmul.mubr.bf16.gmra.mxu0 %v2293
    %v2467 = vpop.f32.mrf.mxu0
    %v2468 = vadd.f32 0.0, %v2467
    %v2469 = vpop.f32.mrf.mxu0
    %v2470 = vadd.f32 0.0, %v2469
    %v2471 = vpop.f32.mrf.mxu0
    %v2472 = vadd.f32 0.0, %v2471
    %v2473 = vpop.f32.mrf.mxu0
    %v2474 = vadd.f32 0.0, %v2473
    %2475 = vmatprep.mubr.bf16.mxu0 0
    %2476 = vmatmul.mubr.bf16.gmra.mxu0 %v2294
    %v2477 = vpop.f32.mrf.mxu0
    %v2478 = vadd.f32 0.0, %v2477
    %v2479 = vpop.f32.mrf.mxu0
    %v2480 = vadd.f32 0.0, %v2479
    %v2481 = vpop.f32.mrf.mxu0
    %v2482 = vadd.f32 0.0, %v2481
    %v2483 = vpop.f32.mrf.mxu0
    %v2484 = vadd.f32 0.0, %v2483
    %2485 = vmatprep.mubr.bf16.mxu0 0
    %2486 = vmatmul.mubr.bf16.gmra.mxu0 %v2295
    %v2487 = vpop.f32.mrf.mxu0
    %v2488 = vadd.f32 0.0, %v2487
    %v2489 = vpop.f32.mrf.mxu0
    %v2490 = vadd.f32 0.0, %v2489
    %v2491 = vpop.f32.mrf.mxu0
    %v2492 = vadd.f32 0.0, %v2491
    %v2493 = vpop.f32.mrf.mxu0
    %v2494 = vadd.f32 0.0, %v2493
    %2495 = vmatprep.mubr.bf16.mxu0 0
    %2496 = vmatmul.mubr.bf16.gmra.mxu0 %v2296
    %v2497 = vpop.f32.mrf.mxu0
    %v2498 = vadd.f32 0.0, %v2497
    %v2499 = vpop.f32.mrf.mxu0
    %v2500 = vadd.f32 0.0, %v2499
    %v2501 = vpop.f32.mrf.mxu0
    %v2502 = vadd.f32 0.0, %v2501
    %v2503 = vpop.f32.mrf.mxu0
    %v2504 = vadd.f32 0.0, %v2503
    %2505 = vdwg.mxu0
    %v2506 = vld [vmem:[%s6] sm:$0x1]
    %v2508 = vlaneseq
    %v2509 = vshrl.u32 %v2508, 7
    %v2510 = vsub.s32 0, %v2509
    %v2511 = vrot.slane %v2506, %v2510
    %v2513 = vadd.f32 %v2428, %v2511
    %v2514 = vadd.f32 %v2432, %v2511
    %v2515 = vadd.f32 %v2438, %v2511
    %v2516 = vadd.f32 %v2442, %v2511
    %v2517 = vadd.f32 %v2448, %v2511
    %v2518 = vadd.f32 %v2452, %v2511
    %v2519 = vadd.f32 %v2458, %v2511
    %v2520 = vadd.f32 %v2462, %v2511
    %v2521 = vadd.f32 %v2468, %v2511
    %v2522 = vadd.f32 %v2472, %v2511
    %v2523 = vadd.f32 %v2478, %v2511
    %v2524 = vadd.f32 %v2482, %v2511
    %v2525 = vadd.f32 %v2488, %v2511
    %v2526 = vadd.f32 %v2492, %v2511
    %v2527 = vadd.f32 %v2498, %v2511
    %v2528 = vadd.f32 %v2502, %v2511
    %v2529 = vpack.c.bf16 %v2434, %v2430
    %v2530 = vpack.c.bf16 %v2444, %v2440
    %v2531 = vpack.c.bf16 %v2454, %v2450
    %v2532 = vpack.c.bf16 %v2464, %v2460
    %v2533 = vpack.c.bf16 %v2474, %v2470
    %v2534 = vpack.c.bf16 %v2484, %v2480
    %v2535 = vpack.c.bf16 %v2494, %v2490
    %v2536 = vpack.c.bf16 %v2504, %v2500
    %2537 = vmatprep.subr.bf16.mxu0 0
    %2538 = vmatpush1.bf16.msra.mxu0 %v989
    %2539 = vmatprep.subr.bf16.mxu0 0
    %2540 = vmatpush1.bf16.msra.mxu0 %v988
    %2541 = vmatprep.subr.bf16.mxu0 0
    %2542 = vmatpush1.bf16.msra.mxu0 %v987
    %2543 = vmatprep.subr.bf16.mxu0 0
    %2544 = vmatpush1.bf16.msra.mxu0 %v986
    %2545 = vmatprep.subr.bf16.mxu0 0
    %2546 = vmatpush1.bf16.msra.mxu0 %v985
    %2547 = vmatprep.subr.bf16.mxu0 0
    %2548 = vmatpush1.bf16.msra.mxu0 %v984
    %2549 = vmatprep.subr.bf16.mxu0 0
    %2550 = vmatpush1.bf16.msra.mxu0 %v983
    %2551 = vmatprep.subr.bf16.mxu0 0
    %2552 = vmatpush1.bf16.msra.mxu0 %v982
    %2553 = vmatprep.subr.bf16.mxu0 0
    %2554 = vmatpush2.bf16.msra.mxu0 0
    %2555 = vmatprep.subr.bf16.mxu0 0
    %2556 = vmatpush2.bf16.msra.mxu0 0
    %2557 = vmatprep.subr.bf16.mxu0 0
    %2558 = vmatpush2.bf16.msra.mxu0 0
    %2559 = vmatprep.subr.bf16.mxu0 0
    %2560 = vmatpush2.bf16.msra.mxu0 0
    %2561 = vmatprep.subr.bf16.mxu0 0
    %2562 = vmatpush2.bf16.msra.mxu0 0
    %2563 = vmatprep.subr.bf16.mxu0 0
    %2564 = vmatpush2.bf16.msra.mxu0 0
    %2565 = vmatprep.subr.bf16.mxu0 0
    %2566 = vmatpush2.bf16.msra.mxu0 0
    %2567 = vmatprep.subr.bf16.mxu0 0
    %2568 = vmatpush2.bf16.msra.mxu0 0
    %2569 = vmatprep.mubr.bf16.mxu0 0
    %2570 = vmatmul.mubr.bf16.gmra.mxu0 %v2529
    %v2571 = vpop.f32.mrf.mxu0
    %v2572 = vadd.f32 0.0, %v2571
    %v2573 = vpop.f32.mrf.mxu0
    %v2574 = vpop.f32.mrf.mxu0
    %v2575 = vadd.f32 0.0, %v2574
    %v2576 = vpop.f32.mrf.mxu0
    %2577 = vmatprep.mubr.bf16.mxu0 0
    %2578 = vmatmul.mubr.bf16.gmra.mxu0 %v2530
    %v2579 = vpop.f32.mrf.mxu0
    %v2580 = vadd.f32 0.0, %v2579
    %v2581 = vpop.f32.mrf.mxu0
    %v2582 = vpop.f32.mrf.mxu0
    %v2583 = vadd.f32 0.0, %v2582
    %v2584 = vpop.f32.mrf.mxu0
    %2585 = vmatprep.mubr.bf16.mxu0 0
    %2586 = vmatmul.mubr.bf16.gmra.mxu0 %v2531
    %v2587 = vpop.f32.mrf.mxu0
    %v2588 = vadd.f32 0.0, %v2587
    %v2589 = vpop.f32.mrf.mxu0
    %v2590 = vpop.f32.mrf.mxu0
    %v2591 = vadd.f32 0.0, %v2590
    %v2592 = vpop.f32.mrf.mxu0
    %2593 = vmatprep.mubr.bf16.mxu0 0
    %2594 = vmatmul.mubr.bf16.gmra.mxu0 %v2532
    %v2595 = vpop.f32.mrf.mxu0
    %v2596 = vadd.f32 0.0, %v2595
    %v2597 = vpop.f32.mrf.mxu0
    %v2598 = vpop.f32.mrf.mxu0
    %v2599 = vadd.f32 0.0, %v2598
    %v2600 = vpop.f32.mrf.mxu0
    %2601 = vmatprep.mubr.bf16.mxu0 0
    %2602 = vmatmul.mubr.bf16.gmra.mxu0 %v2533
    %v2603 = vpop.f32.mrf.mxu0
    %v2604 = vadd.f32 0.0, %v2603
    %v2605 = vpop.f32.mrf.mxu0
    %v2606 = vpop.f32.mrf.mxu0
    %v2607 = vadd.f32 0.0, %v2606
    %v2608 = vpop.f32.mrf.mxu0
    %2609 = vmatprep.mubr.bf16.mxu0 0
    %2610 = vmatmul.mubr.bf16.gmra.mxu0 %v2534
    %v2611 = vpop.f32.mrf.mxu0
    %v2612 = vadd.f32 0.0, %v2611
    %v2613 = vpop.f32.mrf.mxu0
    %v2614 = vpop.f32.mrf.mxu0
    %v2615 = vadd.f32 0.0, %v2614
    %v2616 = vpop.f32.mrf.mxu0
    %2617 = vmatprep.mubr.bf16.mxu0 0
    %2618 = vmatmul.mubr.bf16.gmra.mxu0 %v2535
    %v2619 = vpop.f32.mrf.mxu0
    %v2620 = vadd.f32 0.0, %v2619
    %v2621 = vpop.f32.mrf.mxu0
    %v2622 = vpop.f32.mrf.mxu0
    %v2623 = vadd.f32 0.0, %v2622
    %v2624 = vpop.f32.mrf.mxu0
    %2625 = vmatprep.mubr.bf16.mxu0 0
    %2626 = vmatmul.mubr.bf16.gmra.mxu0 %v2536
    %v2627 = vpop.f32.mrf.mxu0
    %v2628 = vadd.f32 0.0, %v2627
    %v2629 = vpop.f32.mrf.mxu0
    %v2630 = vpop.f32.mrf.mxu0
    %v2631 = vadd.f32 0.0, %v2630
    %v2632 = vpop.f32.mrf.mxu0
    %2633 = vdwg.mxu0
    %v2634 = vpack.c.bf16 %v2575, %v2572
    %v2635 = vpack.c.bf16 %v2583, %v2580
    %v2636 = vpack.c.bf16 %v2591, %v2588
    %v2637 = vpack.c.bf16 %v2599, %v2596
    %v2638 = vpack.c.bf16 %v2607, %v2604
    %v2639 = vpack.c.bf16 %v2615, %v2612
    %v2640 = vpack.c.bf16 %v2623, %v2620
    %v2641 = vpack.c.bf16 %v2631, %v2628
    %2642 = vmatprep.subr.bf16.mxu0 %v1182
    %2643 = vmatpush1.bf16.msra.mxu0 %v1181
    %2644 = vmatprep.subr.bf16.mxu0 %v1180
    %2645 = vmatpush1.bf16.msra.mxu0 %v1179
    %2646 = vmatprep.subr.bf16.mxu0 %v1178
    %2647 = vmatpush1.bf16.msra.mxu0 %v1177
    %2648 = vmatprep.subr.bf16.mxu0 %v1176
    %2649 = vmatpush1.bf16.msra.mxu0 %v1175
    %2650 = vmatprep.subr.bf16.mxu0 %v1174
    %2651 = vmatpush1.bf16.msra.mxu0 %v1173
    %2652 = vmatprep.subr.bf16.mxu0 %v1172
    %2653 = vmatpush1.bf16.msra.mxu0 %v1171
    %2654 = vmatprep.subr.bf16.mxu0 %v1170
    %2655 = vmatpush1.bf16.msra.mxu0 %v1169
    %2656 = vmatprep.subr.bf16.mxu0 %v1168
    %2657 = vmatpush1.bf16.msra.mxu0 %v1167
    %2658 = vmatprep.subr.bf16.mxu0 0
    %2659 = vmatpush2.bf16.msra.mxu0 0
    %2660 = vmatprep.subr.bf16.mxu0 0
    %2661 = vmatpush2.bf16.msra.mxu0 0
    %2662 = vmatprep.subr.bf16.mxu0 0
    %2663 = vmatpush2.bf16.msra.mxu0 0
    %2664 = vmatprep.subr.bf16.mxu0 0
    %2665 = vmatpush2.bf16.msra.mxu0 0
    %2666 = vmatprep.subr.bf16.mxu0 0
    %2667 = vmatpush2.bf16.msra.mxu0 0
    %2668 = vmatprep.subr.bf16.mxu0 0
    %2669 = vmatpush2.bf16.msra.mxu0 0
    %2670 = vmatprep.subr.bf16.mxu0 0
    %2671 = vmatpush2.bf16.msra.mxu0 0
    %2672 = vmatprep.subr.bf16.mxu0 0
    %2673 = vmatpush2.bf16.msra.mxu0 0
    %2674 = vmatprep.mubr.bf16.mxu0 0
    %2675 = vmatmul.mubr.bf16.gmra.mxu0 %v2634
    %v2676 = vpop.f32.mrf.mxu0
    %v2677 = vadd.f32 0.0, %v2676
    %v2678 = vpop.f32.mrf.mxu0
    %v2679 = vadd.f32 0.0, %v2678
    %v2680 = vpop.f32.mrf.mxu0
    %v2681 = vadd.f32 0.0, %v2680
    %v2682 = vpop.f32.mrf.mxu0
    %v2683 = vadd.f32 0.0, %v2682
    %2684 = vmatprep.mubr.bf16.mxu0 0
    %2685 = vmatmul.mubr.bf16.gmra.mxu0 %v2635
    %v2686 = vpop.f32.mrf.mxu0
    %v2687 = vadd.f32 0.0, %v2686
    %v2688 = vpop.f32.mrf.mxu0
    %v2689 = vadd.f32 0.0, %v2688
    %v2690 = vpop.f32.mrf.mxu0
    %v2691 = vadd.f32 0.0, %v2690
    %v2692 = vpop.f32.mrf.mxu0
    %v2693 = vadd.f32 0.0, %v2692
    %2694 = vmatprep.mubr.bf16.mxu0 0
    %2695 = vmatmul.mubr.bf16.gmra.mxu0 %v2636
    %v2696 = vpop.f32.mrf.mxu0
    %v2697 = vadd.f32 0.0, %v2696
    %v2698 = vpop.f32.mrf.mxu0
    %v2699 = vadd.f32 0.0, %v2698
    %v2700 = vpop.f32.mrf.mxu0
    %v2701 = vadd.f32 0.0, %v2700
    %v2702 = vpop.f32.mrf.mxu0
    %v2703 = vadd.f32 0.0, %v2702
    %2704 = vmatprep.mubr.bf16.mxu0 0
    %2705 = vmatmul.mubr.bf16.gmra.mxu0 %v2637
    %v2706 = vpop.f32.mrf.mxu0
    %v2707 = vadd.f32 0.0, %v2706
    %v2708 = vpop.f32.mrf.mxu0
    %v2709 = vadd.f32 0.0, %v2708
    %v2710 = vpop.f32.mrf.mxu0
    %v2711 = vadd.f32 0.0, %v2710
    %v2712 = vpop.f32.mrf.mxu0
    %v2713 = vadd.f32 0.0, %v2712
    %2714 = vmatprep.mubr.bf16.mxu0 0
    %2715 = vmatmul.mubr.bf16.gmra.mxu0 %v2638
    %v2716 = vpop.f32.mrf.mxu0
    %v2717 = vadd.f32 0.0, %v2716
    %v2718 = vpop.f32.mrf.mxu0
    %v2719 = vadd.f32 0.0, %v2718
    %v2720 = vpop.f32.mrf.mxu0
    %v2721 = vadd.f32 0.0, %v2720
    %v2722 = vpop.f32.mrf.mxu0
    %v2723 = vadd.f32 0.0, %v2722
    %2724 = vmatprep.mubr.bf16.mxu0 0
    %2725 = vmatmul.mubr.bf16.gmra.mxu0 %v2639
    %v2726 = vpop.f32.mrf.mxu0
    %v2727 = vadd.f32 0.0, %v2726
    %v2728 = vpop.f32.mrf.mxu0
    %v2729 = vadd.f32 0.0, %v2728
    %v2730 = vpop.f32.mrf.mxu0
    %v2731 = vadd.f32 0.0, %v2730
    %v2732 = vpop.f32.mrf.mxu0
    %v2733 = vadd.f32 0.0, %v2732
    %2734 = vmatprep.mubr.bf16.mxu0 0
    %2735 = vmatmul.mubr.bf16.gmra.mxu0 %v2640
    %v2736 = vpop.f32.mrf.mxu0
    %v2737 = vadd.f32 0.0, %v2736
    %v2738 = vpop.f32.mrf.mxu0
    %v2739 = vadd.f32 0.0, %v2738
    %v2740 = vpop.f32.mrf.mxu0
    %v2741 = vadd.f32 0.0, %v2740
    %v2742 = vpop.f32.mrf.mxu0
    %v2743 = vadd.f32 0.0, %v2742
    %2744 = vmatprep.mubr.bf16.mxu0 0
    %2745 = vmatmul.mubr.bf16.gmra.mxu0 %v2641
    %v2746 = vpop.f32.mrf.mxu0
    %v2747 = vadd.f32 0.0, %v2746
    %v2748 = vpop.f32.mrf.mxu0
    %v2749 = vadd.f32 0.0, %v2748
    %v2750 = vpop.f32.mrf.mxu0
    %v2751 = vadd.f32 0.0, %v2750
    %v2752 = vpop.f32.mrf.mxu0
    %v2753 = vadd.f32 0.0, %v2752
    %2754 = vdwg.mxu0
    %2755 = vst [vmem:[#allocation16] sm:$0xff] %v2677
    %2756 = vst [vmem:[#allocation16 + $0x8] sm:$0xff] %v2679
    %2757 = vst [vmem:[#allocation16 + $0x10] sm:$0xff] %v2681
    %2758 = vst [vmem:[#allocation16 + $0x18] sm:$0xff] %v2683
    %2759 = vst [vmem:[#allocation16 + $0x20] sm:$0xff] %v2687
    %2760 = vst [vmem:[#allocation16 + $0x28] sm:$0xff] %v2689
    %2761 = vst [vmem:[#allocation16 + $0x30] sm:$0xff] %v2691
    %2762 = vst [vmem:[#allocation16 + $0x38] sm:$0xff] %v2693
    %2763 = vst [vmem:[#allocation16 + $0x40] sm:$0xff] %v2697
    %2764 = vst [vmem:[#allocation16 + $0x48] sm:$0xff] %v2699
    %2765 = vst [vmem:[#allocation16 + $0x50] sm:$0xff] %v2701
    %2766 = vst [vmem:[#allocation16 + $0x58] sm:$0xff] %v2703
    %2767 = vst [vmem:[#allocation16 + $0x60] sm:$0xff] %v2707
    %2768 = vst [vmem:[#allocation16 + $0x68] sm:$0xff] %v2709
    %2769 = vst [vmem:[#allocation16 + $0x70] sm:$0xff] %v2711
    %2770 = vst [vmem:[#allocation16 + $0x78] sm:$0xff] %v2713
    %2771 = vst [vmem:[#allocation16 + $0x80] sm:$0xff] %v2717
    %2772 = vst [vmem:[#allocation16 + $0x88] sm:$0xff] %v2719
    %2773 = vst [vmem:[#allocation16 + $0x90] sm:$0xff] %v2721
    %2774 = vst [vmem:[#allocation16 + $0x98] sm:$0xff] %v2723
    %2775 = vst [vmem:[#allocation16 + $0xa0] sm:$0xff] %v2727
    %2776 = vst [vmem:[#allocation16 + $0xa8] sm:$0xff] %v2729
    %2777 = vst [vmem:[#allocation16 + $0xb0] sm:$0xff] %v2731
    %2778 = vst [vmem:[#allocation16 + $0xb8] sm:$0xff] %v2733
    %2779 = vst [vmem:[#allocation16 + $0xc0] sm:$0xff] %v2737
    %2780 = vst [vmem:[#allocation16 + $0xc8] sm:$0xff] %v2739
    %2781 = vst [vmem:[#allocation16 + $0xd0] sm:$0xff] %v2741
    %2782 = vst [vmem:[#allocation16 + $0xd8] sm:$0xff] %v2743
    %2783 = vst [vmem:[#allocation16 + $0xe0] sm:$0xff] %v2747
    %2784 = vst [vmem:[#allocation16 + $0xe8] sm:$0xff] %v2749
    %2785 = vst [vmem:[#allocation16 + $0xf0] sm:$0xff] %v2751
    %2786 = vst [vmem:[#allocation16 + $0xf8] sm:$0xff] %v2753
    %2787 = vst [vmem:[#allocation17] sm:$0xff] %v2513
    %2788 = vst [vmem:[#allocation17 + $0x8] sm:$0xff] %v2514
    %2789 = vst [vmem:[#allocation17 + $0x10] sm:$0xff] %v2515
    %2790 = vst [vmem:[#allocation17 + $0x18] sm:$0xff] %v2516
    %2791 = vst [vmem:[#allocation17 + $0x20] sm:$0xff] %v2517
    %2792 = vst [vmem:[#allocation17 + $0x28] sm:$0xff] %v2518
    %2793 = vst [vmem:[#allocation17 + $0x30] sm:$0xff] %v2519
    %2794 = vst [vmem:[#allocation17 + $0x38] sm:$0xff] %v2520
    %2795 = vst [vmem:[#allocation17 + $0x40] sm:$0xff] %v2521
    %2796 = vst [vmem:[#allocation17 + $0x48] sm:$0xff] %v2522
    %2797 = vst [vmem:[#allocation17 + $0x50] sm:$0xff] %v2523
    %2798 = vst [vmem:[#allocation17 + $0x58] sm:$0xff] %v2524
    %2799 = vst [vmem:[#allocation17 + $0x60] sm:$0xff] %v2525
    %2800 = vst [vmem:[#allocation17 + $0x68] sm:$0xff] %v2526
    %2801 = vst [vmem:[#allocation17 + $0x70] sm:$0xff] %v2527
    %2802 = vst [vmem:[#allocation17 + $0x78] sm:$0xff] %v2528
    // Predicated region
    $region70: #{tpu_custom_call.1} parent=1 // pred_check
      _
    $region71: #{tpu_custom_call.1} parent=1 // pred_check_branch
      %2804 = sbr.rel (0) target = $region73
    $region72: #{tpu_custom_call.1} parent=1 // pred_region
      %s2806 = ssub.s32 4096, 4096
      %2807 = vsyncadd [#allocation4], %s2806
      %s2808 = sshll.u32 [#allocation16], 4
      %s2809 = int_to_ptr.vmem [resolvable:$true] %s2808
      %2814 = dma.vmem_to_hbm [thread:$0]  %s2809, 4096, %s9, [#allocation4], 256, 256, 16
    $region73: #{tpu_custom_call.1} parent=1 // pred_fallthru
      _
    // Predicated region
    $region74: #{tpu_custom_call.1} parent=1 // pred_check
      _
    $region75: #{tpu_custom_call.1} parent=1 // pred_check_branch
      %2816 = sbr.rel (0) target = $region77
    $region76: #{tpu_custom_call.1} parent=1 // pred_region
      %s2818 = ssub.s32 2048, 2048
      %2819 = vsyncadd [#allocation18], %s2818
      %s2820 = sshll.u32 [#allocation17], 4
      %s2821 = int_to_ptr.vmem [resolvable:$true] %s2820
      %2826 = dma.vmem_to_hbm [thread:$0]  %s2821, 2048, %s10, [#allocation18], 128, 128, 8
    $region77: #{tpu_custom_call.1} parent=1 // pred_fallthru
      _
    // Predicated region
    $region78: #{tpu_custom_call.1} parent=1 // pred_check
      _
    $region79: #{tpu_custom_call.1} parent=1 // pred_check_branch
      %2828 = sbr.rel (0) target = $region81
    $region80: #{tpu_custom_call.1} parent=1 // pred_region
      %2829 = dma.done [#allocation4], 4096
    $region81: #{tpu_custom_call.1} parent=1 // pred_fallthru
      _
    // Predicated region
    $region82: #{tpu_custom_call.1} parent=1 // pred_check
      _
    $region83: #{tpu_custom_call.1} parent=1 // pred_check_branch
      %2831 = sbr.rel (0) target = $region85
    $region84: #{tpu_custom_call.1} parent=1 // pred_region
      %2832 = dma.done [#allocation18], 2048
    $region85: #{tpu_custom_call.1} parent=1 // pred_fallthru
      _
    %2833 = vsyncpa [#allocation3], 1
    %2834 = vsyncpa [#allocation6], 1
    %2835 = vsyncpa [#allocation9], 1
    %2836 = vsyncpa [#allocation12], 1
    %2837 = vsyncpa [#allocation15], 1
    %2838 = vsyncpa [#allocation4], 1
    %2839 = vsyncpa [#allocation18], 1

</llo_original>
